<compile_context>
chip_gen: v6e
topology: v6e:2x2x1
jax: 0.10.0
libtpu: 0.0.40
codegen_flags: <defaults>
</compile_context>

<pallas_src>
import jax
import jax.numpy as jnp
from jax.experimental import pallas as pl
from jax.experimental.pallas import tpu as pltpu


def _relu_conv1x1_kernel(w_ref, x_ref, o_ref):
    # w_ref: [tile_co, C_in] bf16   x_ref: [C_in, HW] f32   o_ref: [tile_co, HW] f32
    x = jnp.maximum(x_ref[...], 0.0).astype(w_ref.dtype)   # ReLU on VPU + bf16 pack
    o_ref[...] = jnp.dot(
        w_ref[...], x, preferred_element_type=jnp.float32   # MXU, f32 accumulator
    ).astype(o_ref.dtype)


def prepare_conv_weight(w_oihw):
    """One-time weight preparation: [C_out, C_in, 1, 1] f32 -> [C_out, C_in] bf16.

    Call this once (e.g. at model load) so the f32->bf16 cast is NOT a separate
    XLA op / HBM round-trip on every kernel invocation.
    """
    C_out, C_in = int(w_oihw.shape[0]), int(w_oihw.shape[1])
    return jnp.asarray(w_oihw.reshape(C_out, C_in), dtype=jnp.bfloat16)


def _default_tile_co(C_out):
    """Per-generation output-channel tile: split across the two TensorCores on
    v7x, single tile (fewest grid steps) on single-TC v5e / v6e."""
    try:
        kind = jax.devices()[0].device_kind.lower()
    except Exception:  # pragma: no cover - defensive; default is always valid
        kind = ""
    if "v7" in kind and C_out % 2 == 0 and C_out >= 16:
        return C_out // 2
    return C_out


def relu_conv1x1(x_nchw, w2d_bf16, *, tile_co=None):
    """ReLU followed by a 1x1 conv (no bias), matching the PyTorch module.

    x_nchw:   [N, C_in, H, W] float32
    w2d_bf16: [C_out, C_in] bfloat16 (from prepare_conv_weight)
    returns   [N, C_out, H, W] float32
    """
    N, C_in, H, W = x_nchw.shape
    C_out = w2d_bf16.shape[0]
    HW = H * W

    if tile_co is None:
        tile_co = _default_tile_co(C_out)
    tile_co = min(tile_co, C_out)

    # Pure reshape (contiguous in NCHW) - no transpose anywhere.
    x3d = x_nchw.reshape(N, C_in, HW)

    num_co_tiles = pl.cdiv(C_out, tile_co)
    # Grid order (C_out_tiles, N): batch innermost -> weight block index constant
    # across the inner axis, so weights are DMA'd once and stay VMEM-resident.
    grid = (num_co_tiles, N)

    cost = pl.CostEstimate(
        flops=2 * N * C_out * C_in * HW,
        transcendentals=0,
        bytes_accessed=(x3d.size * x3d.dtype.itemsize
                        + w2d_bf16.size * w2d_bf16.dtype.itemsize
                        + N * C_out * HW * 4),
    )

    out3d = pl.pallas_call(
        _relu_conv1x1_kernel,
        out_shape=jax.ShapeDtypeStruct((N, C_out, HW), x_nchw.dtype),
        grid_spec=pltpu.PrefetchScalarGridSpec(
            num_scalar_prefetch=0,
            grid=grid,
            in_specs=[
                # Weight tile over output channels; index independent of the inner
                # (batch) axis -> resident across all batch elements.
                pl.BlockSpec((tile_co, C_in), lambda j, n: (j, 0)),
                # One batch element's full [C_in, H*W] slab.
                pl.BlockSpec((None, C_in, HW), lambda j, n: (n, 0, 0)),
            ],
            out_specs=pl.BlockSpec((None, tile_co, HW), lambda j, n: (n, j, 0)),
        ),
        compiler_params=pltpu.CompilerParams(
            dimension_semantics=("parallel", "parallel"),
        ),
        cost_estimate=cost,
    )(w2d_bf16, x3d)

    return out3d.reshape(N, C_out, H, W)


if __name__ == "__main__":
    key = jax.random.PRNGKey(0)
    k_x, k_w = jax.random.split(key)

    # Shapes implied by the module: input [1, 256, 14, 14], conv 256 -> 1024, 1x1, no bias.
    N, C_in, H, W = 1, 256, 14, 14
    C_out = 1024

    x = jax.random.normal(k_x, (N, C_in, H, W), dtype=jnp.float32)
    # Deterministic kaiming-uniform-like init for the conv weight.
    fan_in = C_in * 1 * 1
    bound = (1.0 / fan_in) ** 0.5
    w = jax.random.uniform(
        k_w, (C_out, C_in, 1, 1), dtype=jnp.float32, minval=-bound, maxval=bound
    )

    # Weight cast/reshape done ONCE, outside the per-call path.
    w2d = jax.block_until_ready(prepare_conv_weight(w))

    out = relu_conv1x1(x, w2d)
    out = jax.block_until_ready(out)

    # Correctness check against a pure-JAX f32 reference (tolerance accounts for
    # bf16 MXU operands; accumulation stays f32).
    ref = jnp.einsum(
        "nchw,oc->nohw", jnp.maximum(x, 0.0), w.reshape(C_out, C_in)
    )
    assert out.shape == (N, C_out, H, W)
    assert jnp.allclose(out, ref, atol=2e-2, rtol=2e-2)

    print("KERNEL_OK")
</pallas_src>

<mosaic_0001>
module attributes {stable_mosaic.version = 11 : i64} {
  func.func @_relu_conv1x1_kernel(%arg0: i32, %arg1: i32, %arg2: memref<1024x256xbf16, #tpu.memory_space<vmem>>, %arg3: memref<1x256x196xf32, #tpu.memory_space<vmem>>, %arg4: memref<1x1024x196xf32, #tpu.memory_space<vmem>>) attributes {dimension_semantics = [#tpu.dimension_semantics<parallel>, #tpu.dimension_semantics<parallel>], iteration_bounds = array<i64: 1, 1>, scalar_prefetch = 0 : i64, scratch_operands = 0 : i64, tpu.core_type = #tpu.core_type<tc>, window_params = [{transform_indices = @transform_0, window_bounds = array<i64: 1024, 256>}, {transform_indices = @transform_1, window_bounds = array<i64: 1, 256, 196>}, {transform_indices = @transform_2, window_bounds = array<i64: 1, 1024, 196>}]} {
    %c0 = arith.constant 0 : index
    %c0_0 = arith.constant 0 : index
    %c0_1 = arith.constant 0 : index
    %0 = vector.load %arg3[%c0, %c0_0, %c0_1] : memref<1x256x196xf32, #tpu.memory_space<vmem>>, vector<1x256x196xf32>
    %1 = vector.shape_cast %0 : vector<1x256x196xf32> to vector<256x196xf32>
    %cst = arith.constant 0.000000e+00 : f32
    %2 = vector.broadcast %cst : f32 to vector<256x196xf32>
    %3 = arith.maximumf %1, %2 : vector<256x196xf32>
    %4 = arith.truncf %3 : vector<256x196xf32> to vector<256x196xbf16>
    %c0_2 = arith.constant 0 : index
    %c0_3 = arith.constant 0 : index
    %5 = vector.load %arg2[%c0_2, %c0_3] : memref<1024x256xbf16, #tpu.memory_space<vmem>>, vector<1024x256xbf16>
    %cst_4 = arith.constant dense<0.000000e+00> : vector<1024x196xf32>
    %6 = tpu.matmul %5, %4, %cst_4 {dimension_numbers = #tpu.dot_dimension_numbers<[1], [0], [0], [1], [0, 0, 1, 1], [], []>} : vector<1024x256xbf16>, vector<256x196xbf16>, vector<1024x196xf32> -> vector<1024x196xf32>
    %c0_5 = arith.constant 0 : index
    %c0_6 = arith.constant 0 : index
    %c0_7 = arith.constant 0 : index
    %7 = vector.load %arg4[%c0_5, %c0_6, %c0_7] : memref<1x1024x196xf32, #tpu.memory_space<vmem>>, vector<1x1024x196xf32>
    %8 = vector.shape_cast %7 : vector<1x1024x196xf32> to vector<1024x196xf32>
    %9 = vector.shape_cast %6 : vector<1024x196xf32> to vector<1x1024x196xf32>
    tpu.vector_store %arg4[%c0_5, %c0_6, %c0_7], %9 {strides = array<i32>} : memref<1x1024x196xf32, #tpu.memory_space<vmem>>, vector<1x1024x196xf32>,
    return
  }
  func.func @transform_0(%arg0: i32, %arg1: i32) -> (i32, i32) {
    %c0_i32 = arith.constant 0 : i32
    %c0_i32_0 = arith.constant 0 : i32
    return %arg0, %c0_i32 : i32, i32
  }
  func.func @transform_1(%arg0: i32, %arg1: i32) -> (i32, i32, i32) {
    %c0_i32 = arith.constant 0 : i32
    %c0_i32_0 = arith.constant 0 : i32
    %c0_i32_1 = arith.constant 0 : i32
    return %arg1, %c0_i32, %c0_i32_0 : i32, i32, i32
  }
  func.func @transform_2(%arg0: i32, %arg1: i32) -> (i32, i32, i32) {
    %c0_i32 = arith.constant 0 : i32
    %c0_i32_0 = arith.constant 0 : i32
    return %arg1, %arg0, %c0_i32 : i32, i32, i32
  }
}

</mosaic_0001>

<llo_original>
// kernel: tpu_custom_call.1
$region0: #{tpu_custom_call.1}
  #allocation0 [shape = 'u32[]', space=smem, size = 0x4, offset = 0x4, fixed_abs, tag = 'smem constant byte address 0x4 - core index']
  #allocation1 [shape = 'u32[144,128]{1,0:T(1,128)}', space=vmem, size = 0x12000, scoped, tag = 'internal scratch']
  %s0 = inlined_call_operand.hbm [shape: bf16[1024,256], index: 0, kind: input, shape index: {}]
  %s1 = inlined_call_operand.vmem [shape: f32[1,256,196], index: 1, kind: input, shape index: {}]
  %s2 = inlined_call_operand.vmem [shape: f32[1,1024,196], index: 2, kind: output, shape index: {}]
  %s3 = sld [smem:[#allocation0]]
  $region22: #{tpu_custom_call.1} parent=0
    _
  %s5 = ssub.s32 1, %s3
  %s6 = scalar_select 0, %s5, %s3
  $region1: #{tpu_custom_call.1} parent=0
    #allocation2 [shape = 'u8[524288]{0}', space=vmem, size = 0x80000, scoped, tag = 'input window, operand 0, single buffered']
    #allocation3 [shape = 's32[1]{0}', space=sflag, size = 0x4, scoped, tag = 'scoped memory for tpu_custom_call.1']
    %7 = vsyncpa [#allocation3], 0
    // Predicated region
    $region2: #{tpu_custom_call.1} parent=1 // pred_check
      _
    $region3: #{tpu_custom_call.1} parent=1 // pred_check_branch
      %9 = sbr.rel (0) target = $region5
    $region4: #{tpu_custom_call.1} parent=1 // pred_region
      %s11 = ssub.s32 16384, 16384
      %12 = vsyncadd [#allocation3], %s11
      %s13 = sshll.u32 [#allocation2], 4
      %s14 = int_to_ptr.vmem [resolvable:$true] %s13
      %19 = dma.hbm_to_vmem [thread:$0]  %s0, 16384, %s14, [#allocation3], 128, 128, 8
    $region5: #{tpu_custom_call.1} parent=1 // pred_fallthru
      _
    // Predicated region
    $region6: #{tpu_custom_call.1} parent=1 // pred_check
      _
    $region7: #{tpu_custom_call.1} parent=1 // pred_check_branch
      %21 = sbr.rel (0) target = $region9
    $region8: #{tpu_custom_call.1} parent=1 // pred_region
      _
    $region9: #{tpu_custom_call.1} parent=1 // pred_fallthru
      _
    // Predicated region
    $region10: #{tpu_custom_call.1} parent=1 // pred_check
      _
    $region11: #{tpu_custom_call.1} parent=1 // pred_check_branch
      %23 = sbr.rel (0) target = $region13
    $region12: #{tpu_custom_call.1} parent=1 // pred_region
      %24 = dma.done [#allocation3], 16384
    $region13: #{tpu_custom_call.1} parent=1 // pred_fallthru
      _
    %v25 = vld [vmem:[%s1] sm:$0xff]
    %v26 = vld [vmem:[%s1 + $0x8] sm:$0xff]
    %v27 = vld [vmem:[%s1 + $0x10] sm:$0xff]
    %v28 = vld [vmem:[%s1 + $0x18] sm:$0xff]
    %v29 = vld [vmem:[%s1 + $0x20] sm:$0xff]
    %v30 = vld [vmem:[%s1 + $0x28] sm:$0xff]
    %v31 = vld [vmem:[%s1 + $0x30] sm:$0xff]
    %v32 = vld [vmem:[%s1 + $0x38] sm:$0xff]
    %v33 = vld [vmem:[%s1 + $0x40] sm:$0xff]
    %v34 = vld [vmem:[%s1 + $0x48] sm:$0xff]
    %v35 = vld [vmem:[%s1 + $0x50] sm:$0xff]
    %v36 = vld [vmem:[%s1 + $0x58] sm:$0xff]
    %v37 = vld [vmem:[%s1 + $0x60] sm:$0xff]
    %v38 = vld [vmem:[%s1 + $0x68] sm:$0xff]
    %v39 = vld [vmem:[%s1 + $0x70] sm:$0xff]
    %v40 = vld [vmem:[%s1 + $0x78] sm:$0xff]
    %v41 = vld [vmem:[%s1 + $0x80] sm:$0xff]
    %v42 = vld [vmem:[%s1 + $0x88] sm:$0xff]
    %v43 = vld [vmem:[%s1 + $0x90] sm:$0xff]
    %v44 = vld [vmem:[%s1 + $0x98] sm:$0xff]
    %v45 = vld [vmem:[%s1 + $0xa0] sm:$0xff]
    %v46 = vld [vmem:[%s1 + $0xa8] sm:$0xff]
    %v47 = vld [vmem:[%s1 + $0xb0] sm:$0xff]
    %v48 = vld [vmem:[%s1 + $0xb8] sm:$0xff]
    %v49 = vld [vmem:[%s1 + $0xc0] sm:$0xff]
    %v50 = vld [vmem:[%s1 + $0xc8] sm:$0xff]
    %v51 = vld [vmem:[%s1 + $0xd0] sm:$0xff]
    %v52 = vld [vmem:[%s1 + $0xd8] sm:$0xff]
    %v53 = vld [vmem:[%s1 + $0xe0] sm:$0xff]
    %v54 = vld [vmem:[%s1 + $0xe8] sm:$0xff]
    %v55 = vld [vmem:[%s1 + $0xf0] sm:$0xff]
    %v56 = vld [vmem:[%s1 + $0xf8] sm:$0xff]
    %v57 = vld [vmem:[%s1 + $0x100] sm:$0xff]
    %v58 = vld [vmem:[%s1 + $0x108] sm:$0xff]
    %v59 = vld [vmem:[%s1 + $0x110] sm:$0xff]
    %v60 = vld [vmem:[%s1 + $0x118] sm:$0xff]
    %v61 = vld [vmem:[%s1 + $0x120] sm:$0xff]
    %v62 = vld [vmem:[%s1 + $0x128] sm:$0xff]
    %v63 = vld [vmem:[%s1 + $0x130] sm:$0xff]
    %v64 = vld [vmem:[%s1 + $0x138] sm:$0xff]
    %v65 = vld [vmem:[%s1 + $0x140] sm:$0xff]
    %v66 = vld [vmem:[%s1 + $0x148] sm:$0xff]
    %v67 = vld [vmem:[%s1 + $0x150] sm:$0xff]
    %v68 = vld [vmem:[%s1 + $0x158] sm:$0xff]
    %v69 = vld [vmem:[%s1 + $0x160] sm:$0xff]
    %v70 = vld [vmem:[%s1 + $0x168] sm:$0xff]
    %v71 = vld [vmem:[%s1 + $0x170] sm:$0xff]
    %v72 = vld [vmem:[%s1 + $0x178] sm:$0xff]
    %v73 = vld [vmem:[%s1 + $0x180] sm:$0xff]
    %v74 = vld [vmem:[%s1 + $0x188] sm:$0xff]
    %v75 = vld [vmem:[%s1 + $0x190] sm:$0xff]
    %v76 = vld [vmem:[%s1 + $0x198] sm:$0xff]
    %v77 = vld [vmem:[%s1 + $0x1a0] sm:$0xff]
    %v78 = vld [vmem:[%s1 + $0x1a8] sm:$0xff]
    %v79 = vld [vmem:[%s1 + $0x1b0] sm:$0xff]
    %v80 = vld [vmem:[%s1 + $0x1b8] sm:$0xff]
    %v81 = vld [vmem:[%s1 + $0x1c0] sm:$0xff]
    %v82 = vld [vmem:[%s1 + $0x1c8] sm:$0xff]
    %v83 = vld [vmem:[%s1 + $0x1d0] sm:$0xff]
    %v84 = vld [vmem:[%s1 + $0x1d8] sm:$0xff]
    %v85 = vld [vmem:[%s1 + $0x1e0] sm:$0xff]
    %v86 = vld [vmem:[%s1 + $0x1e8] sm:$0xff]
    %v87 = vld [vmem:[%s1 + $0x1f0] sm:$0xff]
    %v88 = vld [vmem:[%s1 + $0x1f8] sm:$0xff]
    %v89 = vmax.f32 %v25, 0.0
    %v90 = vmax.f32 %v26, 0.0
    %v91 = vmax.f32 %v27, 0.0
    %v92 = vmax.f32 %v28, 0.0
    %v93 = vmax.f32 %v29, 0.0
    %v94 = vmax.f32 %v30, 0.0
    %v95 = vmax.f32 %v31, 0.0
    %v96 = vmax.f32 %v32, 0.0
    %v97 = vmax.f32 %v33, 0.0
    %v98 = vmax.f32 %v34, 0.0
    %v99 = vmax.f32 %v35, 0.0
    %v100 = vmax.f32 %v36, 0.0
    %v101 = vmax.f32 %v37, 0.0
    %v102 = vmax.f32 %v38, 0.0
    %v103 = vmax.f32 %v39, 0.0
    %v104 = vmax.f32 %v40, 0.0
    %v105 = vmax.f32 %v41, 0.0
    %v106 = vmax.f32 %v42, 0.0
    %v107 = vmax.f32 %v43, 0.0
    %v108 = vmax.f32 %v44, 0.0
    %v109 = vmax.f32 %v45, 0.0
    %v110 = vmax.f32 %v46, 0.0
    %v111 = vmax.f32 %v47, 0.0
    %v112 = vmax.f32 %v48, 0.0
    %v113 = vmax.f32 %v49, 0.0
    %v114 = vmax.f32 %v50, 0.0
    %v115 = vmax.f32 %v51, 0.0
    %v116 = vmax.f32 %v52, 0.0
    %v117 = vmax.f32 %v53, 0.0
    %v118 = vmax.f32 %v54, 0.0
    %v119 = vmax.f32 %v55, 0.0
    %v120 = vmax.f32 %v56, 0.0
    %v121 = vmax.f32 %v57, 0.0
    %v122 = vmax.f32 %v58, 0.0
    %v123 = vmax.f32 %v59, 0.0
    %v124 = vmax.f32 %v60, 0.0
    %v125 = vmax.f32 %v61, 0.0
    %v126 = vmax.f32 %v62, 0.0
    %v127 = vmax.f32 %v63, 0.0
    %v128 = vmax.f32 %v64, 0.0
    %v129 = vmax.f32 %v65, 0.0
    %v130 = vmax.f32 %v66, 0.0
    %v131 = vmax.f32 %v67, 0.0
    %v132 = vmax.f32 %v68, 0.0
    %v133 = vmax.f32 %v69, 0.0
    %v134 = vmax.f32 %v70, 0.0
    %v135 = vmax.f32 %v71, 0.0
    %v136 = vmax.f32 %v72, 0.0
    %v137 = vmax.f32 %v73, 0.0
    %v138 = vmax.f32 %v74, 0.0
    %v139 = vmax.f32 %v75, 0.0
    %v140 = vmax.f32 %v76, 0.0
    %v141 = vmax.f32 %v77, 0.0
    %v142 = vmax.f32 %v78, 0.0
    %v143 = vmax.f32 %v79, 0.0
    %v144 = vmax.f32 %v80, 0.0
    %v145 = vmax.f32 %v81, 0.0
    %v146 = vmax.f32 %v82, 0.0
    %v147 = vmax.f32 %v83, 0.0
    %v148 = vmax.f32 %v84, 0.0
    %v149 = vmax.f32 %v85, 0.0
    %v150 = vmax.f32 %v86, 0.0
    %v151 = vmax.f32 %v87, 0.0
    %v152 = vmax.f32 %v88, 0.0
    %v153 = vpack.c.bf16 %v91, %v89
    %v154 = vpack.c.bf16 %v92, %v90
    %v155 = vpack.c.bf16 %v95, %v93
    %v156 = vpack.c.bf16 %v96, %v94
    %v157 = vpack.c.bf16 %v99, %v97
    %v158 = vpack.c.bf16 %v100, %v98
    %v159 = vpack.c.bf16 %v103, %v101
    %v160 = vpack.c.bf16 %v104, %v102
    %v161 = vpack.c.bf16 %v107, %v105
    %v162 = vpack.c.bf16 %v108, %v106
    %v163 = vpack.c.bf16 %v111, %v109
    %v164 = vpack.c.bf16 %v112, %v110
    %v165 = vpack.c.bf16 %v115, %v113
    %v166 = vpack.c.bf16 %v116, %v114
    %v167 = vpack.c.bf16 %v119, %v117
    %v168 = vpack.c.bf16 %v120, %v118
    %v169 = vpack.c.bf16 %v123, %v121
    %v170 = vpack.c.bf16 %v124, %v122
    %v171 = vpack.c.bf16 %v127, %v125
    %v172 = vpack.c.bf16 %v128, %v126
    %v173 = vpack.c.bf16 %v131, %v129
    %v174 = vpack.c.bf16 %v132, %v130
    %v175 = vpack.c.bf16 %v135, %v133
    %v176 = vpack.c.bf16 %v136, %v134
    %v177 = vpack.c.bf16 %v139, %v137
    %v178 = vpack.c.bf16 %v140, %v138
    %v179 = vpack.c.bf16 %v143, %v141
    %v180 = vpack.c.bf16 %v144, %v142
    %v181 = vpack.c.bf16 %v147, %v145
    %v182 = vpack.c.bf16 %v148, %v146
    %v183 = vpack.c.bf16 %v151, %v149
    %v184 = vpack.c.bf16 %v152, %v150
    %v185 = vld [vmem:[#allocation2] sm:$0xff]
    %v186 = vld [vmem:[#allocation2 + $0x8] sm:$0xff]
    %v187 = vld [vmem:[#allocation2 + $0x10] sm:$0xff]
    %v188 = vld [vmem:[#allocation2 + $0x18] sm:$0xff]
    %v189 = vld [vmem:[#allocation2 + $0x20] sm:$0xff]
    %v190 = vld [vmem:[#allocation2 + $0x28] sm:$0xff]
    %v191 = vld [vmem:[#allocation2 + $0x30] sm:$0xff]
    %v192 = vld [vmem:[#allocation2 + $0x38] sm:$0xff]
    %v193 = vld [vmem:[#allocation2 + $0x40] sm:$0xff]
    %v194 = vld [vmem:[#allocation2 + $0x48] sm:$0xff]
    %v195 = vld [vmem:[#allocation2 + $0x50] sm:$0xff]
    %v196 = vld [vmem:[#allocation2 + $0x58] sm:$0xff]
    %v197 = vld [vmem:[#allocation2 + $0x60] sm:$0xff]
    %v198 = vld [vmem:[#allocation2 + $0x68] sm:$0xff]
    %v199 = vld [vmem:[#allocation2 + $0x70] sm:$0xff]
    %v200 = vld [vmem:[#allocation2 + $0x78] sm:$0xff]
    %v201 = vld [vmem:[#allocation2 + $0x80] sm:$0xff]
    %v202 = vld [vmem:[#allocation2 + $0x88] sm:$0xff]
    %v203 = vld [vmem:[#allocation2 + $0x90] sm:$0xff]
    %v204 = vld [vmem:[#allocation2 + $0x98] sm:$0xff]
    %v205 = vld [vmem:[#allocation2 + $0xa0] sm:$0xff]
    %v206 = vld [vmem:[#allocation2 + $0xa8] sm:$0xff]
    %v207 = vld [vmem:[#allocation2 + $0xb0] sm:$0xff]
    %v208 = vld [vmem:[#allocation2 + $0xb8] sm:$0xff]
    %v209 = vld [vmem:[#allocation2 + $0xc0] sm:$0xff]
    %v210 = vld [vmem:[#allocation2 + $0xc8] sm:$0xff]
    %v211 = vld [vmem:[#allocation2 + $0xd0] sm:$0xff]
    %v212 = vld [vmem:[#allocation2 + $0xd8] sm:$0xff]
    %v213 = vld [vmem:[#allocation2 + $0xe0] sm:$0xff]
    %v214 = vld [vmem:[#allocation2 + $0xe8] sm:$0xff]
    %v215 = vld [vmem:[#allocation2 + $0xf0] sm:$0xff]
    %v216 = vld [vmem:[#allocation2 + $0xf8] sm:$0xff]
    %v217 = vld [vmem:[#allocation2 + $0x100] sm:$0xff]
    %v218 = vld [vmem:[#allocation2 + $0x108] sm:$0xff]
    %v219 = vld [vmem:[#allocation2 + $0x110] sm:$0xff]
    %v220 = vld [vmem:[#allocation2 + $0x118] sm:$0xff]
    %v221 = vld [vmem:[#allocation2 + $0x120] sm:$0xff]
    %v222 = vld [vmem:[#allocation2 + $0x128] sm:$0xff]
    %v223 = vld [vmem:[#allocation2 + $0x130] sm:$0xff]
    %v224 = vld [vmem:[#allocation2 + $0x138] sm:$0xff]
    %v225 = vld [vmem:[#allocation2 + $0x140] sm:$0xff]
    %v226 = vld [vmem:[#allocation2 + $0x148] sm:$0xff]
    %v227 = vld [vmem:[#allocation2 + $0x150] sm:$0xff]
    %v228 = vld [vmem:[#allocation2 + $0x158] sm:$0xff]
    %v229 = vld [vmem:[#allocation2 + $0x160] sm:$0xff]
    %v230 = vld [vmem:[#allocation2 + $0x168] sm:$0xff]
    %v231 = vld [vmem:[#allocation2 + $0x170] sm:$0xff]
    %v232 = vld [vmem:[#allocation2 + $0x178] sm:$0xff]
    %v233 = vld [vmem:[#allocation2 + $0x180] sm:$0xff]
    %v234 = vld [vmem:[#allocation2 + $0x188] sm:$0xff]
    %v235 = vld [vmem:[#allocation2 + $0x190] sm:$0xff]
    %v236 = vld [vmem:[#allocation2 + $0x198] sm:$0xff]
    %v237 = vld [vmem:[#allocation2 + $0x1a0] sm:$0xff]
    %v238 = vld [vmem:[#allocation2 + $0x1a8] sm:$0xff]
    %v239 = vld [vmem:[#allocation2 + $0x1b0] sm:$0xff]
    %v240 = vld [vmem:[#allocation2 + $0x1b8] sm:$0xff]
    %v241 = vld [vmem:[#allocation2 + $0x1c0] sm:$0xff]
    %v242 = vld [vmem:[#allocation2 + $0x1c8] sm:$0xff]
    %v243 = vld [vmem:[#allocation2 + $0x1d0] sm:$0xff]
    %v244 = vld [vmem:[#allocation2 + $0x1d8] sm:$0xff]
    %v245 = vld [vmem:[#allocation2 + $0x1e0] sm:$0xff]
    %v246 = vld [vmem:[#allocation2 + $0x1e8] sm:$0xff]
    %v247 = vld [vmem:[#allocation2 + $0x1f0] sm:$0xff]
    %v248 = vld [vmem:[#allocation2 + $0x1f8] sm:$0xff]
    %v249 = vld [vmem:[#allocation2 + $0x200] sm:$0xff]
    %v250 = vld [vmem:[#allocation2 + $0x208] sm:$0xff]
    %v251 = vld [vmem:[#allocation2 + $0x210] sm:$0xff]
    %v252 = vld [vmem:[#allocation2 + $0x218] sm:$0xff]
    %v253 = vld [vmem:[#allocation2 + $0x220] sm:$0xff]
    %v254 = vld [vmem:[#allocation2 + $0x228] sm:$0xff]
    %v255 = vld [vmem:[#allocation2 + $0x230] sm:$0xff]
    %v256 = vld [vmem:[#allocation2 + $0x238] sm:$0xff]
    %v257 = vld [vmem:[#allocation2 + $0x240] sm:$0xff]
    %v258 = vld [vmem:[#allocation2 + $0x248] sm:$0xff]
    %v259 = vld [vmem:[#allocation2 + $0x250] sm:$0xff]
    %v260 = vld [vmem:[#allocation2 + $0x258] sm:$0xff]
    %v261 = vld [vmem:[#allocation2 + $0x260] sm:$0xff]
    %v262 = vld [vmem:[#allocation2 + $0x268] sm:$0xff]
    %v263 = vld [vmem:[#allocation2 + $0x270] sm:$0xff]
    %v264 = vld [vmem:[#allocation2 + $0x278] sm:$0xff]
    %v265 = vld [vmem:[#allocation2 + $0x280] sm:$0xff]
    %v266 = vld [vmem:[#allocation2 + $0x288] sm:$0xff]
    %v267 = vld [vmem:[#allocation2 + $0x290] sm:$0xff]
    %v268 = vld [vmem:[#allocation2 + $0x298] sm:$0xff]
    %v269 = vld [vmem:[#allocation2 + $0x2a0] sm:$0xff]
    %v270 = vld [vmem:[#allocation2 + $0x2a8] sm:$0xff]
    %v271 = vld [vmem:[#allocation2 + $0x2b0] sm:$0xff]
    %v272 = vld [vmem:[#allocation2 + $0x2b8] sm:$0xff]
    %v273 = vld [vmem:[#allocation2 + $0x2c0] sm:$0xff]
    %v274 = vld [vmem:[#allocation2 + $0x2c8] sm:$0xff]
    %v275 = vld [vmem:[#allocation2 + $0x2d0] sm:$0xff]
    %v276 = vld [vmem:[#allocation2 + $0x2d8] sm:$0xff]
    %v277 = vld [vmem:[#allocation2 + $0x2e0] sm:$0xff]
    %v278 = vld [vmem:[#allocation2 + $0x2e8] sm:$0xff]
    %v279 = vld [vmem:[#allocation2 + $0x2f0] sm:$0xff]
    %v280 = vld [vmem:[#allocation2 + $0x2f8] sm:$0xff]
    %v281 = vld [vmem:[#allocation2 + $0x300] sm:$0xff]
    %v282 = vld [vmem:[#allocation2 + $0x308] sm:$0xff]
    %v283 = vld [vmem:[#allocation2 + $0x310] sm:$0xff]
    %v284 = vld [vmem:[#allocation2 + $0x318] sm:$0xff]
    %v285 = vld [vmem:[#allocation2 + $0x320] sm:$0xff]
    %v286 = vld [vmem:[#allocation2 + $0x328] sm:$0xff]
    %v287 = vld [vmem:[#allocation2 + $0x330] sm:$0xff]
    %v288 = vld [vmem:[#allocation2 + $0x338] sm:$0xff]
    %v289 = vld [vmem:[#allocation2 + $0x340] sm:$0xff]
    %v290 = vld [vmem:[#allocation2 + $0x348] sm:$0xff]
    %v291 = vld [vmem:[#allocation2 + $0x350] sm:$0xff]
    %v292 = vld [vmem:[#allocation2 + $0x358] sm:$0xff]
    %v293 = vld [vmem:[#allocation2 + $0x360] sm:$0xff]
    %v294 = vld [vmem:[#allocation2 + $0x368] sm:$0xff]
    %v295 = vld [vmem:[#allocation2 + $0x370] sm:$0xff]
    %v296 = vld [vmem:[#allocation2 + $0x378] sm:$0xff]
    %v297 = vld [vmem:[#allocation2 + $0x380] sm:$0xff]
    %v298 = vld [vmem:[#allocation2 + $0x388] sm:$0xff]
    %v299 = vld [vmem:[#allocation2 + $0x390] sm:$0xff]
    %v300 = vld [vmem:[#allocation2 + $0x398] sm:$0xff]
    %v301 = vld [vmem:[#allocation2 + $0x3a0] sm:$0xff]
    %v302 = vld [vmem:[#allocation2 + $0x3a8] sm:$0xff]
    %v303 = vld [vmem:[#allocation2 + $0x3b0] sm:$0xff]
    %v304 = vld [vmem:[#allocation2 + $0x3b8] sm:$0xff]
    %v305 = vld [vmem:[#allocation2 + $0x3c0] sm:$0xff]
    %v306 = vld [vmem:[#allocation2 + $0x3c8] sm:$0xff]
    %v307 = vld [vmem:[#allocation2 + $0x3d0] sm:$0xff]
    %v308 = vld [vmem:[#allocation2 + $0x3d8] sm:$0xff]
    %v309 = vld [vmem:[#allocation2 + $0x3e0] sm:$0xff]
    %v310 = vld [vmem:[#allocation2 + $0x3e8] sm:$0xff]
    %v311 = vld [vmem:[#allocation2 + $0x3f0] sm:$0xff]
    %v312 = vld [vmem:[#allocation2 + $0x3f8] sm:$0xff]
    %v441 = vunpack.c.l.b16 %v185
    %v442 = vunpack.c.h.b16 %v185
    %v443 = vunpack.c.l.b16 %v186
    %v444 = vunpack.c.h.b16 %v186
    %v445 = vunpack.c.l.b16 %v187
    %v446 = vunpack.c.h.b16 %v187
    %v447 = vunpack.c.l.b16 %v188
    %v448 = vunpack.c.h.b16 %v188
    %v449 = vunpack.c.l.b16 %v189
    %v450 = vunpack.c.h.b16 %v189
    %v451 = vunpack.c.l.b16 %v190
    %v452 = vunpack.c.h.b16 %v190
    %v453 = vunpack.c.l.b16 %v191
    %v454 = vunpack.c.h.b16 %v191
    %v455 = vunpack.c.l.b16 %v192
    %v456 = vunpack.c.h.b16 %v192
    %v457 = vunpack.c.l.b16 %v193
    %v458 = vunpack.c.h.b16 %v193
    %v459 = vunpack.c.l.b16 %v194
    %v460 = vunpack.c.h.b16 %v194
    %v461 = vunpack.c.l.b16 %v195
    %v462 = vunpack.c.h.b16 %v195
    %v463 = vunpack.c.l.b16 %v196
    %v464 = vunpack.c.h.b16 %v196
    %v465 = vunpack.c.l.b16 %v197
    %v466 = vunpack.c.h.b16 %v197
    %v467 = vunpack.c.l.b16 %v198
    %v468 = vunpack.c.h.b16 %v198
    %v469 = vunpack.c.l.b16 %v199
    %v470 = vunpack.c.h.b16 %v199
    %v471 = vunpack.c.l.b16 %v200
    %v472 = vunpack.c.h.b16 %v200
    %v473 = vunpack.c.l.b16 %v201
    %v474 = vunpack.c.h.b16 %v201
    %v475 = vunpack.c.l.b16 %v202
    %v476 = vunpack.c.h.b16 %v202
    %v477 = vunpack.c.l.b16 %v203
    %v478 = vunpack.c.h.b16 %v203
    %v479 = vunpack.c.l.b16 %v204
    %v480 = vunpack.c.h.b16 %v204
    %v481 = vunpack.c.l.b16 %v205
    %v482 = vunpack.c.h.b16 %v205
    %v483 = vunpack.c.l.b16 %v206
    %v484 = vunpack.c.h.b16 %v206
    %v485 = vunpack.c.l.b16 %v207
    %v486 = vunpack.c.h.b16 %v207
    %v487 = vunpack.c.l.b16 %v208
    %v488 = vunpack.c.h.b16 %v208
    %v489 = vunpack.c.l.b16 %v209
    %v490 = vunpack.c.h.b16 %v209
    %v491 = vunpack.c.l.b16 %v210
    %v492 = vunpack.c.h.b16 %v210
    %v493 = vunpack.c.l.b16 %v211
    %v494 = vunpack.c.h.b16 %v211
    %v495 = vunpack.c.l.b16 %v212
    %v496 = vunpack.c.h.b16 %v212
    %v497 = vunpack.c.l.b16 %v213
    %v498 = vunpack.c.h.b16 %v213
    %v499 = vunpack.c.l.b16 %v214
    %v500 = vunpack.c.h.b16 %v214
    %v501 = vunpack.c.l.b16 %v215
    %v502 = vunpack.c.h.b16 %v215
    %v503 = vunpack.c.l.b16 %v216
    %v504 = vunpack.c.h.b16 %v216
    %v505 = vunpack.c.l.b16 %v217
    %v506 = vunpack.c.h.b16 %v217
    %v507 = vunpack.c.l.b16 %v218
    %v508 = vunpack.c.h.b16 %v218
    %v509 = vunpack.c.l.b16 %v219
    %v510 = vunpack.c.h.b16 %v219
    %v511 = vunpack.c.l.b16 %v220
    %v512 = vunpack.c.h.b16 %v220
    %v513 = vunpack.c.l.b16 %v221
    %v514 = vunpack.c.h.b16 %v221
    %v515 = vunpack.c.l.b16 %v222
    %v516 = vunpack.c.h.b16 %v222
    %v517 = vunpack.c.l.b16 %v223
    %v518 = vunpack.c.h.b16 %v223
    %v519 = vunpack.c.l.b16 %v224
    %v520 = vunpack.c.h.b16 %v224
    %v521 = vunpack.c.l.b16 %v225
    %v522 = vunpack.c.h.b16 %v225
    %v523 = vunpack.c.l.b16 %v226
    %v524 = vunpack.c.h.b16 %v226
    %v525 = vunpack.c.l.b16 %v227
    %v526 = vunpack.c.h.b16 %v227
    %v527 = vunpack.c.l.b16 %v228
    %v528 = vunpack.c.h.b16 %v228
    %v529 = vunpack.c.l.b16 %v229
    %v530 = vunpack.c.h.b16 %v229
    %v531 = vunpack.c.l.b16 %v230
    %v532 = vunpack.c.h.b16 %v230
    %v533 = vunpack.c.l.b16 %v231
    %v534 = vunpack.c.h.b16 %v231
    %v535 = vunpack.c.l.b16 %v232
    %v536 = vunpack.c.h.b16 %v232
    %v537 = vunpack.c.l.b16 %v233
    %v538 = vunpack.c.h.b16 %v233
    %v539 = vunpack.c.l.b16 %v234
    %v540 = vunpack.c.h.b16 %v234
    %v541 = vunpack.c.l.b16 %v235
    %v542 = vunpack.c.h.b16 %v235
    %v543 = vunpack.c.l.b16 %v236
    %v544 = vunpack.c.h.b16 %v236
    %v545 = vunpack.c.l.b16 %v237
    %v546 = vunpack.c.h.b16 %v237
    %v547 = vunpack.c.l.b16 %v238
    %v548 = vunpack.c.h.b16 %v238
    %v549 = vunpack.c.l.b16 %v239
    %v550 = vunpack.c.h.b16 %v239
    %v551 = vunpack.c.l.b16 %v240
    %v552 = vunpack.c.h.b16 %v240
    %v553 = vunpack.c.l.b16 %v241
    %v554 = vunpack.c.h.b16 %v241
    %v555 = vunpack.c.l.b16 %v242
    %v556 = vunpack.c.h.b16 %v242
    %v557 = vunpack.c.l.b16 %v243
    %v558 = vunpack.c.h.b16 %v243
    %v559 = vunpack.c.l.b16 %v244
    %v560 = vunpack.c.h.b16 %v244
    %v561 = vunpack.c.l.b16 %v245
    %v562 = vunpack.c.h.b16 %v245
    %v563 = vunpack.c.l.b16 %v246
    %v564 = vunpack.c.h.b16 %v246
    %v565 = vunpack.c.l.b16 %v247
    %v566 = vunpack.c.h.b16 %v247
    %v567 = vunpack.c.l.b16 %v248
    %v568 = vunpack.c.h.b16 %v248
    %v569 = vunpack.c.l.b16 %v249
    %v570 = vunpack.c.h.b16 %v249
    %v571 = vunpack.c.l.b16 %v250
    %v572 = vunpack.c.h.b16 %v250
    %v573 = vunpack.c.l.b16 %v251
    %v574 = vunpack.c.h.b16 %v251
    %v575 = vunpack.c.l.b16 %v252
    %v576 = vunpack.c.h.b16 %v252
    %v577 = vunpack.c.l.b16 %v253
    %v578 = vunpack.c.h.b16 %v253
    %v579 = vunpack.c.l.b16 %v254
    %v580 = vunpack.c.h.b16 %v254
    %v581 = vunpack.c.l.b16 %v255
    %v582 = vunpack.c.h.b16 %v255
    %v583 = vunpack.c.l.b16 %v256
    %v584 = vunpack.c.h.b16 %v256
    %v585 = vunpack.c.l.b16 %v257
    %v586 = vunpack.c.h.b16 %v257
    %v587 = vunpack.c.l.b16 %v258
    %v588 = vunpack.c.h.b16 %v258
    %v589 = vunpack.c.l.b16 %v259
    %v590 = vunpack.c.h.b16 %v259
    %v591 = vunpack.c.l.b16 %v260
    %v592 = vunpack.c.h.b16 %v260
    %v593 = vunpack.c.l.b16 %v261
    %v594 = vunpack.c.h.b16 %v261
    %v595 = vunpack.c.l.b16 %v262
    %v596 = vunpack.c.h.b16 %v262
    %v597 = vunpack.c.l.b16 %v263
    %v598 = vunpack.c.h.b16 %v263
    %v599 = vunpack.c.l.b16 %v264
    %v600 = vunpack.c.h.b16 %v264
    %v601 = vunpack.c.l.b16 %v265
    %v602 = vunpack.c.h.b16 %v265
    %v603 = vunpack.c.l.b16 %v266
    %v604 = vunpack.c.h.b16 %v266
    %v605 = vunpack.c.l.b16 %v267
    %v606 = vunpack.c.h.b16 %v267
    %v607 = vunpack.c.l.b16 %v268
    %v608 = vunpack.c.h.b16 %v268
    %v609 = vunpack.c.l.b16 %v269
    %v610 = vunpack.c.h.b16 %v269
    %v611 = vunpack.c.l.b16 %v270
    %v612 = vunpack.c.h.b16 %v270
    %v613 = vunpack.c.l.b16 %v271
    %v614 = vunpack.c.h.b16 %v271
    %v615 = vunpack.c.l.b16 %v272
    %v616 = vunpack.c.h.b16 %v272
    %v617 = vunpack.c.l.b16 %v273
    %v618 = vunpack.c.h.b16 %v273
    %v619 = vunpack.c.l.b16 %v274
    %v620 = vunpack.c.h.b16 %v274
    %v621 = vunpack.c.l.b16 %v275
    %v622 = vunpack.c.h.b16 %v275
    %v623 = vunpack.c.l.b16 %v276
    %v624 = vunpack.c.h.b16 %v276
    %v625 = vunpack.c.l.b16 %v277
    %v626 = vunpack.c.h.b16 %v277
    %v627 = vunpack.c.l.b16 %v278
    %v628 = vunpack.c.h.b16 %v278
    %v629 = vunpack.c.l.b16 %v279
    %v630 = vunpack.c.h.b16 %v279
    %v631 = vunpack.c.l.b16 %v280
    %v632 = vunpack.c.h.b16 %v280
    %v633 = vunpack.c.l.b16 %v281
    %v634 = vunpack.c.h.b16 %v281
    %v635 = vunpack.c.l.b16 %v282
    %v636 = vunpack.c.h.b16 %v282
    %v637 = vunpack.c.l.b16 %v283
    %v638 = vunpack.c.h.b16 %v283
    %v639 = vunpack.c.l.b16 %v284
    %v640 = vunpack.c.h.b16 %v284
    %v641 = vunpack.c.l.b16 %v285
    %v642 = vunpack.c.h.b16 %v285
    %v643 = vunpack.c.l.b16 %v286
    %v644 = vunpack.c.h.b16 %v286
    %v645 = vunpack.c.l.b16 %v287
    %v646 = vunpack.c.h.b16 %v287
    %v647 = vunpack.c.l.b16 %v288
    %v648 = vunpack.c.h.b16 %v288
    %v649 = vunpack.c.l.b16 %v289
    %v650 = vunpack.c.h.b16 %v289
    %v651 = vunpack.c.l.b16 %v290
    %v652 = vunpack.c.h.b16 %v290
    %v653 = vunpack.c.l.b16 %v291
    %v654 = vunpack.c.h.b16 %v291
    %v655 = vunpack.c.l.b16 %v292
    %v656 = vunpack.c.h.b16 %v292
    %v657 = vunpack.c.l.b16 %v293
    %v658 = vunpack.c.h.b16 %v293
    %v659 = vunpack.c.l.b16 %v294
    %v660 = vunpack.c.h.b16 %v294
    %v661 = vunpack.c.l.b16 %v295
    %v662 = vunpack.c.h.b16 %v295
    %v663 = vunpack.c.l.b16 %v296
    %v664 = vunpack.c.h.b16 %v296
    %v665 = vunpack.c.l.b16 %v297
    %v666 = vunpack.c.h.b16 %v297
    %v667 = vunpack.c.l.b16 %v298
    %v668 = vunpack.c.h.b16 %v298
    %v669 = vunpack.c.l.b16 %v299
    %v670 = vunpack.c.h.b16 %v299
    %v671 = vunpack.c.l.b16 %v300
    %v672 = vunpack.c.h.b16 %v300
    %v673 = vunpack.c.l.b16 %v301
    %v674 = vunpack.c.h.b16 %v301
    %v675 = vunpack.c.l.b16 %v302
    %v676 = vunpack.c.h.b16 %v302
    %v677 = vunpack.c.l.b16 %v303
    %v678 = vunpack.c.h.b16 %v303
    %v679 = vunpack.c.l.b16 %v304
    %v680 = vunpack.c.h.b16 %v304
    %v681 = vunpack.c.l.b16 %v305
    %v682 = vunpack.c.h.b16 %v305
    %v683 = vunpack.c.l.b16 %v306
    %v684 = vunpack.c.h.b16 %v306
    %v685 = vunpack.c.l.b16 %v307
    %v686 = vunpack.c.h.b16 %v307
    %v687 = vunpack.c.l.b16 %v308
    %v688 = vunpack.c.h.b16 %v308
    %v689 = vunpack.c.l.b16 %v309
    %v690 = vunpack.c.h.b16 %v309
    %v691 = vunpack.c.l.b16 %v310
    %v692 = vunpack.c.h.b16 %v310
    %v693 = vunpack.c.l.b16 %v311
    %v694 = vunpack.c.h.b16 %v311
    %v695 = vunpack.c.l.b16 %v312
    %v696 = vunpack.c.h.b16 %v312
    %v697 = vpack.c.b16 %v443, %v441
    %v698 = vpack.c.b16 %v444, %v442
    %v699 = vpack.c.b16 %v447, %v445
    %v700 = vpack.c.b16 %v448, %v446
    %v701 = vpack.c.b16 %v451, %v449
    %v702 = vpack.c.b16 %v452, %v450
    %v703 = vpack.c.b16 %v455, %v453
    %v704 = vpack.c.b16 %v456, %v454
    %v705 = vpack.c.b16 %v459, %v457
    %v706 = vpack.c.b16 %v460, %v458
    %v707 = vpack.c.b16 %v463, %v461
    %v708 = vpack.c.b16 %v464, %v462
    %v709 = vpack.c.b16 %v467, %v465
    %v710 = vpack.c.b16 %v468, %v466
    %v711 = vpack.c.b16 %v471, %v469
    %v712 = vpack.c.b16 %v472, %v470
    %v713 = vpack.c.b16 %v475, %v473
    %v714 = vpack.c.b16 %v476, %v474
    %v715 = vpack.c.b16 %v479, %v477
    %v716 = vpack.c.b16 %v480, %v478
    %v717 = vpack.c.b16 %v483, %v481
    %v718 = vpack.c.b16 %v484, %v482
    %v719 = vpack.c.b16 %v487, %v485
    %v720 = vpack.c.b16 %v488, %v486
    %v721 = vpack.c.b16 %v491, %v489
    %v722 = vpack.c.b16 %v492, %v490
    %v723 = vpack.c.b16 %v495, %v493
    %v724 = vpack.c.b16 %v496, %v494
    %v725 = vpack.c.b16 %v499, %v497
    %v726 = vpack.c.b16 %v500, %v498
    %v727 = vpack.c.b16 %v503, %v501
    %v728 = vpack.c.b16 %v504, %v502
    %v729 = vpack.c.b16 %v507, %v505
    %v730 = vpack.c.b16 %v508, %v506
    %v731 = vpack.c.b16 %v511, %v509
    %v732 = vpack.c.b16 %v512, %v510
    %v733 = vpack.c.b16 %v515, %v513
    %v734 = vpack.c.b16 %v516, %v514
    %v735 = vpack.c.b16 %v519, %v517
    %v736 = vpack.c.b16 %v520, %v518
    %v737 = vpack.c.b16 %v523, %v521
    %v738 = vpack.c.b16 %v524, %v522
    %v739 = vpack.c.b16 %v527, %v525
    %v740 = vpack.c.b16 %v528, %v526
    %v741 = vpack.c.b16 %v531, %v529
    %v742 = vpack.c.b16 %v532, %v530
    %v743 = vpack.c.b16 %v535, %v533
    %v744 = vpack.c.b16 %v536, %v534
    %v745 = vpack.c.b16 %v539, %v537
    %v746 = vpack.c.b16 %v540, %v538
    %v747 = vpack.c.b16 %v543, %v541
    %v748 = vpack.c.b16 %v544, %v542
    %v749 = vpack.c.b16 %v547, %v545
    %v750 = vpack.c.b16 %v548, %v546
    %v751 = vpack.c.b16 %v551, %v549
    %v752 = vpack.c.b16 %v552, %v550
    %v753 = vpack.c.b16 %v555, %v553
    %v754 = vpack.c.b16 %v556, %v554
    %v755 = vpack.c.b16 %v559, %v557
    %v756 = vpack.c.b16 %v560, %v558
    %v757 = vpack.c.b16 %v563, %v561
    %v758 = vpack.c.b16 %v564, %v562
    %v759 = vpack.c.b16 %v567, %v565
    %v760 = vpack.c.b16 %v568, %v566
    %v761 = vpack.c.b16 %v571, %v569
    %v762 = vpack.c.b16 %v572, %v570
    %v763 = vpack.c.b16 %v575, %v573
    %v764 = vpack.c.b16 %v576, %v574
    %v765 = vpack.c.b16 %v579, %v577
    %v766 = vpack.c.b16 %v580, %v578
    %v767 = vpack.c.b16 %v583, %v581
    %v768 = vpack.c.b16 %v584, %v582
    %v769 = vpack.c.b16 %v587, %v585
    %v770 = vpack.c.b16 %v588, %v586
    %v771 = vpack.c.b16 %v591, %v589
    %v772 = vpack.c.b16 %v592, %v590
    %v773 = vpack.c.b16 %v595, %v593
    %v774 = vpack.c.b16 %v596, %v594
    %v775 = vpack.c.b16 %v599, %v597
    %v776 = vpack.c.b16 %v600, %v598
    %v777 = vpack.c.b16 %v603, %v601
    %v778 = vpack.c.b16 %v604, %v602
    %v779 = vpack.c.b16 %v607, %v605
    %v780 = vpack.c.b16 %v608, %v606
    %v781 = vpack.c.b16 %v611, %v609
    %v782 = vpack.c.b16 %v612, %v610
    %v783 = vpack.c.b16 %v615, %v613
    %v784 = vpack.c.b16 %v616, %v614
    %v785 = vpack.c.b16 %v619, %v617
    %v786 = vpack.c.b16 %v620, %v618
    %v787 = vpack.c.b16 %v623, %v621
    %v788 = vpack.c.b16 %v624, %v622
    %v789 = vpack.c.b16 %v627, %v625
    %v790 = vpack.c.b16 %v628, %v626
    %v791 = vpack.c.b16 %v631, %v629
    %v792 = vpack.c.b16 %v632, %v630
    %v793 = vpack.c.b16 %v635, %v633
    %v794 = vpack.c.b16 %v636, %v634
    %v795 = vpack.c.b16 %v639, %v637
    %v796 = vpack.c.b16 %v640, %v638
    %v797 = vpack.c.b16 %v643, %v641
    %v798 = vpack.c.b16 %v644, %v642
    %v799 = vpack.c.b16 %v647, %v645
    %v800 = vpack.c.b16 %v648, %v646
    %v801 = vpack.c.b16 %v651, %v649
    %v802 = vpack.c.b16 %v652, %v650
    %v803 = vpack.c.b16 %v655, %v653
    %v804 = vpack.c.b16 %v656, %v654
    %v805 = vpack.c.b16 %v659, %v657
    %v806 = vpack.c.b16 %v660, %v658
    %v807 = vpack.c.b16 %v663, %v661
    %v808 = vpack.c.b16 %v664, %v662
    %v809 = vpack.c.b16 %v667, %v665
    %v810 = vpack.c.b16 %v668, %v666
    %v811 = vpack.c.b16 %v671, %v669
    %v812 = vpack.c.b16 %v672, %v670
    %v813 = vpack.c.b16 %v675, %v673
    %v814 = vpack.c.b16 %v676, %v674
    %v815 = vpack.c.b16 %v679, %v677
    %v816 = vpack.c.b16 %v680, %v678
    %v817 = vpack.c.b16 %v683, %v681
    %v818 = vpack.c.b16 %v684, %v682
    %v819 = vpack.c.b16 %v687, %v685
    %v820 = vpack.c.b16 %v688, %v686
    %v821 = vpack.c.b16 %v691, %v689
    %v822 = vpack.c.b16 %v692, %v690
    %v823 = vpack.c.b16 %v695, %v693
    %v824 = vpack.c.b16 %v696, %v694
    %953 = vmatprep.subr.bf16.mxu0 %v168
    %954 = vmatpush1.bf16.msra.mxu0 %v167
    %955 = vmatprep.subr.bf16.mxu0 %v166
    %956 = vmatpush1.bf16.msra.mxu0 %v165
    %957 = vmatprep.subr.bf16.mxu0 %v164
    %958 = vmatpush1.bf16.msra.mxu0 %v163
    %959 = vmatprep.subr.bf16.mxu0 %v162
    %960 = vmatpush1.bf16.msra.mxu0 %v161
    %961 = vmatprep.subr.bf16.mxu0 %v160
    %962 = vmatpush1.bf16.msra.mxu0 %v159
    %963 = vmatprep.subr.bf16.mxu0 %v158
    %964 = vmatpush1.bf16.msra.mxu0 %v157
    %965 = vmatprep.subr.bf16.mxu0 %v156
    %966 = vmatpush1.bf16.msra.mxu0 %v155
    %967 = vmatprep.subr.bf16.mxu0 %v154
    %968 = vmatpush1.bf16.msra.mxu0 %v153
    %969 = vmatprep.subr.bf16.mxu0 %v184
    %970 = vmatpush2.bf16.msra.mxu0 %v183
    %971 = vmatprep.subr.bf16.mxu0 %v182
    %972 = vmatpush2.bf16.msra.mxu0 %v181
    %973 = vmatprep.subr.bf16.mxu0 %v180
    %974 = vmatpush2.bf16.msra.mxu0 %v179
    %975 = vmatprep.subr.bf16.mxu0 %v178
    %976 = vmatpush2.bf16.msra.mxu0 %v177
    %977 = vmatprep.subr.bf16.mxu0 %v176
    %978 = vmatpush2.bf16.msra.mxu0 %v175
    %979 = vmatprep.subr.bf16.mxu0 %v174
    %980 = vmatpush2.bf16.msra.mxu0 %v173
    %981 = vmatprep.subr.bf16.mxu0 %v172
    %982 = vmatpush2.bf16.msra.mxu0 %v171
    %983 = vmatprep.subr.bf16.mxu0 %v170
    %984 = vmatpush2.bf16.msra.mxu0 %v169
    %985 = vmatprep.mubr.bf16.mxu0 %v698
    %986 = vmatmul.mubr.bf16.gmra.mxu0 %v697
    %v987 = vpop.f32.mrf.mxu0
    %v988 = vadd.f32 0.0, %v987
    %v989 = vpop.f32.mrf.mxu0
    %v990 = vadd.f32 0.0, %v989
    %v991 = vpop.f32.mrf.mxu0
    %v992 = vadd.f32 0.0, %v991
    %v993 = vpop.f32.mrf.mxu0
    %v994 = vadd.f32 0.0, %v993
    %995 = vmatprep.mubr.bf16.mxu0 %v700
    %996 = vmatmul.mubr.bf16.gmra.mxu0 %v699
    %v997 = vpop.f32.mrf.mxu0
    %v998 = vadd.f32 0.0, %v997
    %v999 = vpop.f32.mrf.mxu0
    %v1000 = vadd.f32 0.0, %v999
    %v1001 = vpop.f32.mrf.mxu0
    %v1002 = vadd.f32 0.0, %v1001
    %v1003 = vpop.f32.mrf.mxu0
    %v1004 = vadd.f32 0.0, %v1003
    %1005 = vmatprep.mubr.bf16.mxu0 %v702
    %1006 = vmatmul.mubr.bf16.gmra.mxu0 %v701
    %v1007 = vpop.f32.mrf.mxu0
    %v1008 = vadd.f32 0.0, %v1007
    %v1009 = vpop.f32.mrf.mxu0
    %v1010 = vadd.f32 0.0, %v1009
    %v1011 = vpop.f32.mrf.mxu0
    %v1012 = vadd.f32 0.0, %v1011
    %v1013 = vpop.f32.mrf.mxu0
    %v1014 = vadd.f32 0.0, %v1013
    %1015 = vmatprep.mubr.bf16.mxu0 %v704
    %1016 = vmatmul.mubr.bf16.gmra.mxu0 %v703
    %v1017 = vpop.f32.mrf.mxu0
    %v1018 = vadd.f32 0.0, %v1017
    %v1019 = vpop.f32.mrf.mxu0
    %v1020 = vadd.f32 0.0, %v1019
    %v1021 = vpop.f32.mrf.mxu0
    %v1022 = vadd.f32 0.0, %v1021
    %v1023 = vpop.f32.mrf.mxu0
    %v1024 = vadd.f32 0.0, %v1023
    %1025 = vmatprep.mubr.bf16.mxu0 %v706
    %1026 = vmatmul.mubr.bf16.gmra.mxu0 %v705
    %v1027 = vpop.f32.mrf.mxu0
    %v1028 = vadd.f32 0.0, %v1027
    %v1029 = vpop.f32.mrf.mxu0
    %v1030 = vadd.f32 0.0, %v1029
    %v1031 = vpop.f32.mrf.mxu0
    %v1032 = vadd.f32 0.0, %v1031
    %v1033 = vpop.f32.mrf.mxu0
    %v1034 = vadd.f32 0.0, %v1033
    %1035 = vmatprep.mubr.bf16.mxu0 %v708
    %1036 = vmatmul.mubr.bf16.gmra.mxu0 %v707
    %v1037 = vpop.f32.mrf.mxu0
    %v1038 = vadd.f32 0.0, %v1037
    %v1039 = vpop.f32.mrf.mxu0
    %v1040 = vadd.f32 0.0, %v1039
    %v1041 = vpop.f32.mrf.mxu0
    %v1042 = vadd.f32 0.0, %v1041
    %v1043 = vpop.f32.mrf.mxu0
    %v1044 = vadd.f32 0.0, %v1043
    %1045 = vmatprep.mubr.bf16.mxu0 %v710
    %1046 = vmatmul.mubr.bf16.gmra.mxu0 %v709
    %v1047 = vpop.f32.mrf.mxu0
    %v1048 = vadd.f32 0.0, %v1047
    %v1049 = vpop.f32.mrf.mxu0
    %v1050 = vadd.f32 0.0, %v1049
    %v1051 = vpop.f32.mrf.mxu0
    %v1052 = vadd.f32 0.0, %v1051
    %v1053 = vpop.f32.mrf.mxu0
    %v1054 = vadd.f32 0.0, %v1053
    %1055 = vmatprep.mubr.bf16.mxu0 %v712
    %1056 = vmatmul.mubr.bf16.gmra.mxu0 %v711
    %v1057 = vpop.f32.mrf.mxu0
    %v1058 = vadd.f32 0.0, %v1057
    %v1059 = vpop.f32.mrf.mxu0
    %v1060 = vadd.f32 0.0, %v1059
    %v1061 = vpop.f32.mrf.mxu0
    %v1062 = vadd.f32 0.0, %v1061
    %v1063 = vpop.f32.mrf.mxu0
    %v1064 = vadd.f32 0.0, %v1063
    %1065 = vmatprep.mubr.bf16.mxu0 %v714
    %1066 = vmatmul.mubr.bf16.gmra.mxu0 %v713
    %v1067 = vpop.f32.mrf.mxu0
    %v1068 = vadd.f32 0.0, %v1067
    %v1069 = vpop.f32.mrf.mxu0
    %v1070 = vadd.f32 0.0, %v1069
    %v1071 = vpop.f32.mrf.mxu0
    %v1072 = vadd.f32 0.0, %v1071
    %v1073 = vpop.f32.mrf.mxu0
    %v1074 = vadd.f32 0.0, %v1073
    %1075 = vmatprep.mubr.bf16.mxu0 %v716
    %1076 = vmatmul.mubr.bf16.gmra.mxu0 %v715
    %v1077 = vpop.f32.mrf.mxu0
    %v1078 = vadd.f32 0.0, %v1077
    %v1079 = vpop.f32.mrf.mxu0
    %v1080 = vadd.f32 0.0, %v1079
    %v1081 = vpop.f32.mrf.mxu0
    %v1082 = vadd.f32 0.0, %v1081
    %v1083 = vpop.f32.mrf.mxu0
    %v1084 = vadd.f32 0.0, %v1083
    %1085 = vmatprep.mubr.bf16.mxu0 %v718
    %1086 = vmatmul.mubr.bf16.gmra.mxu0 %v717
    %v1087 = vpop.f32.mrf.mxu0
    %v1088 = vadd.f32 0.0, %v1087
    %v1089 = vpop.f32.mrf.mxu0
    %v1090 = vadd.f32 0.0, %v1089
    %v1091 = vpop.f32.mrf.mxu0
    %v1092 = vadd.f32 0.0, %v1091
    %v1093 = vpop.f32.mrf.mxu0
    %v1094 = vadd.f32 0.0, %v1093
    %1095 = vmatprep.mubr.bf16.mxu0 %v720
    %1096 = vmatmul.mubr.bf16.gmra.mxu0 %v719
    %v1097 = vpop.f32.mrf.mxu0
    %v1098 = vadd.f32 0.0, %v1097
    %v1099 = vpop.f32.mrf.mxu0
    %v1100 = vadd.f32 0.0, %v1099
    %v1101 = vpop.f32.mrf.mxu0
    %v1102 = vadd.f32 0.0, %v1101
    %v1103 = vpop.f32.mrf.mxu0
    %v1104 = vadd.f32 0.0, %v1103
    %1105 = vmatprep.mubr.bf16.mxu0 %v722
    %1106 = vmatmul.mubr.bf16.gmra.mxu0 %v721
    %v1107 = vpop.f32.mrf.mxu0
    %v1108 = vadd.f32 0.0, %v1107
    %v1109 = vpop.f32.mrf.mxu0
    %v1110 = vadd.f32 0.0, %v1109
    %v1111 = vpop.f32.mrf.mxu0
    %v1112 = vadd.f32 0.0, %v1111
    %v1113 = vpop.f32.mrf.mxu0
    %v1114 = vadd.f32 0.0, %v1113
    %1115 = vmatprep.mubr.bf16.mxu0 %v724
    %1116 = vmatmul.mubr.bf16.gmra.mxu0 %v723
    %v1117 = vpop.f32.mrf.mxu0
    %v1118 = vadd.f32 0.0, %v1117
    %v1119 = vpop.f32.mrf.mxu0
    %v1120 = vadd.f32 0.0, %v1119
    %v1121 = vpop.f32.mrf.mxu0
    %v1122 = vadd.f32 0.0, %v1121
    %v1123 = vpop.f32.mrf.mxu0
    %v1124 = vadd.f32 0.0, %v1123
    %1125 = vmatprep.mubr.bf16.mxu0 %v726
    %1126 = vmatmul.mubr.bf16.gmra.mxu0 %v725
    %v1127 = vpop.f32.mrf.mxu0
    %v1128 = vadd.f32 0.0, %v1127
    %v1129 = vpop.f32.mrf.mxu0
    %v1130 = vadd.f32 0.0, %v1129
    %v1131 = vpop.f32.mrf.mxu0
    %v1132 = vadd.f32 0.0, %v1131
    %v1133 = vpop.f32.mrf.mxu0
    %v1134 = vadd.f32 0.0, %v1133
    %1135 = vmatprep.mubr.bf16.mxu0 %v728
    %1136 = vmatmul.mubr.bf16.gmra.mxu0 %v727
    %v1137 = vpop.f32.mrf.mxu0
    %v1138 = vadd.f32 0.0, %v1137
    %v1139 = vpop.f32.mrf.mxu0
    %v1140 = vadd.f32 0.0, %v1139
    %v1141 = vpop.f32.mrf.mxu0
    %v1142 = vadd.f32 0.0, %v1141
    %v1143 = vpop.f32.mrf.mxu0
    %v1144 = vadd.f32 0.0, %v1143
    %1145 = vmatprep.mubr.bf16.mxu0 %v730
    %1146 = vmatmul.mubr.bf16.gmra.mxu0 %v729
    %v1147 = vpop.f32.mrf.mxu0
    %v1148 = vadd.f32 0.0, %v1147
    %v1149 = vpop.f32.mrf.mxu0
    %v1150 = vadd.f32 0.0, %v1149
    %v1151 = vpop.f32.mrf.mxu0
    %v1152 = vadd.f32 0.0, %v1151
    %v1153 = vpop.f32.mrf.mxu0
    %v1154 = vadd.f32 0.0, %v1153
    %1155 = vmatprep.mubr.bf16.mxu0 %v732
    %1156 = vmatmul.mubr.bf16.gmra.mxu0 %v731
    %v1157 = vpop.f32.mrf.mxu0
    %v1158 = vadd.f32 0.0, %v1157
    %v1159 = vpop.f32.mrf.mxu0
    %v1160 = vadd.f32 0.0, %v1159
    %v1161 = vpop.f32.mrf.mxu0
    %v1162 = vadd.f32 0.0, %v1161
    %v1163 = vpop.f32.mrf.mxu0
    %v1164 = vadd.f32 0.0, %v1163
    %1165 = vmatprep.mubr.bf16.mxu0 %v734
    %1166 = vmatmul.mubr.bf16.gmra.mxu0 %v733
    %v1167 = vpop.f32.mrf.mxu0
    %v1168 = vadd.f32 0.0, %v1167
    %v1169 = vpop.f32.mrf.mxu0
    %v1170 = vadd.f32 0.0, %v1169
    %v1171 = vpop.f32.mrf.mxu0
    %v1172 = vadd.f32 0.0, %v1171
    %v1173 = vpop.f32.mrf.mxu0
    %v1174 = vadd.f32 0.0, %v1173
    %1175 = vmatprep.mubr.bf16.mxu0 %v736
    %1176 = vmatmul.mubr.bf16.gmra.mxu0 %v735
    %v1177 = vpop.f32.mrf.mxu0
    %v1178 = vadd.f32 0.0, %v1177
    %v1179 = vpop.f32.mrf.mxu0
    %v1180 = vadd.f32 0.0, %v1179
    %v1181 = vpop.f32.mrf.mxu0
    %v1182 = vadd.f32 0.0, %v1181
    %v1183 = vpop.f32.mrf.mxu0
    %v1184 = vadd.f32 0.0, %v1183
    %1185 = vmatprep.mubr.bf16.mxu0 %v738
    %1186 = vmatmul.mubr.bf16.gmra.mxu0 %v737
    %v1187 = vpop.f32.mrf.mxu0
    %v1188 = vadd.f32 0.0, %v1187
    %v1189 = vpop.f32.mrf.mxu0
    %v1190 = vadd.f32 0.0, %v1189
    %v1191 = vpop.f32.mrf.mxu0
    %v1192 = vadd.f32 0.0, %v1191
    %v1193 = vpop.f32.mrf.mxu0
    %v1194 = vadd.f32 0.0, %v1193
    %1195 = vmatprep.mubr.bf16.mxu0 %v740
    %1196 = vmatmul.mubr.bf16.gmra.mxu0 %v739
    %v1197 = vpop.f32.mrf.mxu0
    %v1198 = vadd.f32 0.0, %v1197
    %v1199 = vpop.f32.mrf.mxu0
    %v1200 = vadd.f32 0.0, %v1199
    %v1201 = vpop.f32.mrf.mxu0
    %v1202 = vadd.f32 0.0, %v1201
    %v1203 = vpop.f32.mrf.mxu0
    %v1204 = vadd.f32 0.0, %v1203
    %1205 = vmatprep.mubr.bf16.mxu0 %v742
    %1206 = vmatmul.mubr.bf16.gmra.mxu0 %v741
    %v1207 = vpop.f32.mrf.mxu0
    %v1208 = vadd.f32 0.0, %v1207
    %v1209 = vpop.f32.mrf.mxu0
    %v1210 = vadd.f32 0.0, %v1209
    %v1211 = vpop.f32.mrf.mxu0
    %v1212 = vadd.f32 0.0, %v1211
    %v1213 = vpop.f32.mrf.mxu0
    %v1214 = vadd.f32 0.0, %v1213
    %1215 = vmatprep.mubr.bf16.mxu0 %v744
    %1216 = vmatmul.mubr.bf16.gmra.mxu0 %v743
    %v1217 = vpop.f32.mrf.mxu0
    %v1218 = vadd.f32 0.0, %v1217
    %v1219 = vpop.f32.mrf.mxu0
    %v1220 = vadd.f32 0.0, %v1219
    %v1221 = vpop.f32.mrf.mxu0
    %v1222 = vadd.f32 0.0, %v1221
    %v1223 = vpop.f32.mrf.mxu0
    %v1224 = vadd.f32 0.0, %v1223
    %1225 = vmatprep.mubr.bf16.mxu0 %v746
    %1226 = vmatmul.mubr.bf16.gmra.mxu0 %v745
    %v1227 = vpop.f32.mrf.mxu0
    %v1228 = vadd.f32 0.0, %v1227
    %v1229 = vpop.f32.mrf.mxu0
    %v1230 = vadd.f32 0.0, %v1229
    %v1231 = vpop.f32.mrf.mxu0
    %v1232 = vadd.f32 0.0, %v1231
    %v1233 = vpop.f32.mrf.mxu0
    %v1234 = vadd.f32 0.0, %v1233
    %1235 = vmatprep.mubr.bf16.mxu0 %v748
    %1236 = vmatmul.mubr.bf16.gmra.mxu0 %v747
    %v1237 = vpop.f32.mrf.mxu0
    %v1238 = vadd.f32 0.0, %v1237
    %v1239 = vpop.f32.mrf.mxu0
    %v1240 = vadd.f32 0.0, %v1239
    %v1241 = vpop.f32.mrf.mxu0
    %v1242 = vadd.f32 0.0, %v1241
    %v1243 = vpop.f32.mrf.mxu0
    %v1244 = vadd.f32 0.0, %v1243
    %1245 = vmatprep.mubr.bf16.mxu0 %v750
    %1246 = vmatmul.mubr.bf16.gmra.mxu0 %v749
    %v1247 = vpop.f32.mrf.mxu0
    %v1248 = vadd.f32 0.0, %v1247
    %v1249 = vpop.f32.mrf.mxu0
    %v1250 = vadd.f32 0.0, %v1249
    %v1251 = vpop.f32.mrf.mxu0
    %v1252 = vadd.f32 0.0, %v1251
    %v1253 = vpop.f32.mrf.mxu0
    %v1254 = vadd.f32 0.0, %v1253
    %1255 = vmatprep.mubr.bf16.mxu0 %v752
    %1256 = vmatmul.mubr.bf16.gmra.mxu0 %v751
    %v1257 = vpop.f32.mrf.mxu0
    %v1258 = vadd.f32 0.0, %v1257
    %v1259 = vpop.f32.mrf.mxu0
    %v1260 = vadd.f32 0.0, %v1259
    %v1261 = vpop.f32.mrf.mxu0
    %v1262 = vadd.f32 0.0, %v1261
    %v1263 = vpop.f32.mrf.mxu0
    %v1264 = vadd.f32 0.0, %v1263
    %1265 = vmatprep.mubr.bf16.mxu0 %v754
    %1266 = vmatmul.mubr.bf16.gmra.mxu0 %v753
    %v1267 = vpop.f32.mrf.mxu0
    %v1268 = vadd.f32 0.0, %v1267
    %v1269 = vpop.f32.mrf.mxu0
    %v1270 = vadd.f32 0.0, %v1269
    %v1271 = vpop.f32.mrf.mxu0
    %v1272 = vadd.f32 0.0, %v1271
    %v1273 = vpop.f32.mrf.mxu0
    %v1274 = vadd.f32 0.0, %v1273
    %1275 = vmatprep.mubr.bf16.mxu0 %v756
    %1276 = vmatmul.mubr.bf16.gmra.mxu0 %v755
    %v1277 = vpop.f32.mrf.mxu0
    %v1278 = vadd.f32 0.0, %v1277
    %v1279 = vpop.f32.mrf.mxu0
    %v1280 = vadd.f32 0.0, %v1279
    %v1281 = vpop.f32.mrf.mxu0
    %v1282 = vadd.f32 0.0, %v1281
    %v1283 = vpop.f32.mrf.mxu0
    %v1284 = vadd.f32 0.0, %v1283
    %1285 = vmatprep.mubr.bf16.mxu0 %v758
    %1286 = vmatmul.mubr.bf16.gmra.mxu0 %v757
    %v1287 = vpop.f32.mrf.mxu0
    %v1288 = vadd.f32 0.0, %v1287
    %v1289 = vpop.f32.mrf.mxu0
    %v1290 = vadd.f32 0.0, %v1289
    %v1291 = vpop.f32.mrf.mxu0
    %v1292 = vadd.f32 0.0, %v1291
    %v1293 = vpop.f32.mrf.mxu0
    %v1294 = vadd.f32 0.0, %v1293
    %1295 = vmatprep.mubr.bf16.mxu0 %v760
    %1296 = vmatmul.mubr.bf16.gmra.mxu0 %v759
    %v1297 = vpop.f32.mrf.mxu0
    %v1298 = vadd.f32 0.0, %v1297
    %v1299 = vpop.f32.mrf.mxu0
    %v1300 = vadd.f32 0.0, %v1299
    %v1301 = vpop.f32.mrf.mxu0
    %v1302 = vadd.f32 0.0, %v1301
    %v1303 = vpop.f32.mrf.mxu0
    %v1304 = vadd.f32 0.0, %v1303
    %1305 = vmatprep.mubr.bf16.mxu0 %v762
    %1306 = vmatmul.mubr.bf16.gmra.mxu0 %v761
    %v1307 = vpop.f32.mrf.mxu0
    %v1308 = vadd.f32 0.0, %v1307
    %v1309 = vpop.f32.mrf.mxu0
    %v1310 = vadd.f32 0.0, %v1309
    %v1311 = vpop.f32.mrf.mxu0
    %v1312 = vadd.f32 0.0, %v1311
    %v1313 = vpop.f32.mrf.mxu0
    %v1314 = vadd.f32 0.0, %v1313
    %1315 = vmatprep.mubr.bf16.mxu0 %v764
    %1316 = vmatmul.mubr.bf16.gmra.mxu0 %v763
    %v1317 = vpop.f32.mrf.mxu0
    %v1318 = vadd.f32 0.0, %v1317
    %v1319 = vpop.f32.mrf.mxu0
    %v1320 = vadd.f32 0.0, %v1319
    %v1321 = vpop.f32.mrf.mxu0
    %v1322 = vadd.f32 0.0, %v1321
    %v1323 = vpop.f32.mrf.mxu0
    %v1324 = vadd.f32 0.0, %v1323
    %1325 = vmatprep.mubr.bf16.mxu0 %v766
    %1326 = vmatmul.mubr.bf16.gmra.mxu0 %v765
    %v1327 = vpop.f32.mrf.mxu0
    %v1328 = vadd.f32 0.0, %v1327
    %v1329 = vpop.f32.mrf.mxu0
    %v1330 = vadd.f32 0.0, %v1329
    %v1331 = vpop.f32.mrf.mxu0
    %v1332 = vadd.f32 0.0, %v1331
    %v1333 = vpop.f32.mrf.mxu0
    %v1334 = vadd.f32 0.0, %v1333
    %1335 = vmatprep.mubr.bf16.mxu0 %v768
    %1336 = vmatmul.mubr.bf16.gmra.mxu0 %v767
    %v1337 = vpop.f32.mrf.mxu0
    %v1338 = vadd.f32 0.0, %v1337
    %v1339 = vpop.f32.mrf.mxu0
    %v1340 = vadd.f32 0.0, %v1339
    %v1341 = vpop.f32.mrf.mxu0
    %v1342 = vadd.f32 0.0, %v1341
    %v1343 = vpop.f32.mrf.mxu0
    %v1344 = vadd.f32 0.0, %v1343
    %1345 = vmatprep.mubr.bf16.mxu0 %v770
    %1346 = vmatmul.mubr.bf16.gmra.mxu0 %v769
    %v1347 = vpop.f32.mrf.mxu0
    %v1348 = vadd.f32 0.0, %v1347
    %v1349 = vpop.f32.mrf.mxu0
    %v1350 = vadd.f32 0.0, %v1349
    %v1351 = vpop.f32.mrf.mxu0
    %v1352 = vadd.f32 0.0, %v1351
    %v1353 = vpop.f32.mrf.mxu0
    %v1354 = vadd.f32 0.0, %v1353
    %1355 = vmatprep.mubr.bf16.mxu0 %v772
    %1356 = vmatmul.mubr.bf16.gmra.mxu0 %v771
    %v1357 = vpop.f32.mrf.mxu0
    %v1358 = vadd.f32 0.0, %v1357
    %v1359 = vpop.f32.mrf.mxu0
    %v1360 = vadd.f32 0.0, %v1359
    %v1361 = vpop.f32.mrf.mxu0
    %v1362 = vadd.f32 0.0, %v1361
    %v1363 = vpop.f32.mrf.mxu0
    %v1364 = vadd.f32 0.0, %v1363
    %1365 = vmatprep.mubr.bf16.mxu0 %v774
    %1366 = vmatmul.mubr.bf16.gmra.mxu0 %v773
    %v1367 = vpop.f32.mrf.mxu0
    %v1368 = vadd.f32 0.0, %v1367
    %v1369 = vpop.f32.mrf.mxu0
    %v1370 = vadd.f32 0.0, %v1369
    %v1371 = vpop.f32.mrf.mxu0
    %v1372 = vadd.f32 0.0, %v1371
    %v1373 = vpop.f32.mrf.mxu0
    %v1374 = vadd.f32 0.0, %v1373
    %1375 = vmatprep.mubr.bf16.mxu0 %v776
    %1376 = vmatmul.mubr.bf16.gmra.mxu0 %v775
    %v1377 = vpop.f32.mrf.mxu0
    %v1378 = vadd.f32 0.0, %v1377
    %v1379 = vpop.f32.mrf.mxu0
    %v1380 = vadd.f32 0.0, %v1379
    %v1381 = vpop.f32.mrf.mxu0
    %v1382 = vadd.f32 0.0, %v1381
    %v1383 = vpop.f32.mrf.mxu0
    %v1384 = vadd.f32 0.0, %v1383
    %1385 = vmatprep.mubr.bf16.mxu0 %v778
    %1386 = vmatmul.mubr.bf16.gmra.mxu0 %v777
    %v1387 = vpop.f32.mrf.mxu0
    %v1388 = vadd.f32 0.0, %v1387
    %v1389 = vpop.f32.mrf.mxu0
    %v1390 = vadd.f32 0.0, %v1389
    %v1391 = vpop.f32.mrf.mxu0
    %v1392 = vadd.f32 0.0, %v1391
    %v1393 = vpop.f32.mrf.mxu0
    %v1394 = vadd.f32 0.0, %v1393
    %1395 = vmatprep.mubr.bf16.mxu0 %v780
    %1396 = vmatmul.mubr.bf16.gmra.mxu0 %v779
    %v1397 = vpop.f32.mrf.mxu0
    %v1398 = vadd.f32 0.0, %v1397
    %v1399 = vpop.f32.mrf.mxu0
    %v1400 = vadd.f32 0.0, %v1399
    %v1401 = vpop.f32.mrf.mxu0
    %v1402 = vadd.f32 0.0, %v1401
    %v1403 = vpop.f32.mrf.mxu0
    %v1404 = vadd.f32 0.0, %v1403
    %1405 = vmatprep.mubr.bf16.mxu0 %v782
    %1406 = vmatmul.mubr.bf16.gmra.mxu0 %v781
    %v1407 = vpop.f32.mrf.mxu0
    %v1408 = vadd.f32 0.0, %v1407
    %v1409 = vpop.f32.mrf.mxu0
    %v1410 = vadd.f32 0.0, %v1409
    %v1411 = vpop.f32.mrf.mxu0
    %v1412 = vadd.f32 0.0, %v1411
    %v1413 = vpop.f32.mrf.mxu0
    %v1414 = vadd.f32 0.0, %v1413
    %1415 = vmatprep.mubr.bf16.mxu0 %v784
    %1416 = vmatmul.mubr.bf16.gmra.mxu0 %v783
    %v1417 = vpop.f32.mrf.mxu0
    %v1418 = vadd.f32 0.0, %v1417
    %v1419 = vpop.f32.mrf.mxu0
    %v1420 = vadd.f32 0.0, %v1419
    %v1421 = vpop.f32.mrf.mxu0
    %v1422 = vadd.f32 0.0, %v1421
    %v1423 = vpop.f32.mrf.mxu0
    %v1424 = vadd.f32 0.0, %v1423
    %1425 = vmatprep.mubr.bf16.mxu0 %v786
    %1426 = vmatmul.mubr.bf16.gmra.mxu0 %v785
    %v1427 = vpop.f32.mrf.mxu0
    %v1428 = vadd.f32 0.0, %v1427
    %v1429 = vpop.f32.mrf.mxu0
    %v1430 = vadd.f32 0.0, %v1429
    %v1431 = vpop.f32.mrf.mxu0
    %v1432 = vadd.f32 0.0, %v1431
    %v1433 = vpop.f32.mrf.mxu0
    %v1434 = vadd.f32 0.0, %v1433
    %1435 = vmatprep.mubr.bf16.mxu0 %v788
    %1436 = vmatmul.mubr.bf16.gmra.mxu0 %v787
    %v1437 = vpop.f32.mrf.mxu0
    %v1438 = vadd.f32 0.0, %v1437
    %v1439 = vpop.f32.mrf.mxu0
    %v1440 = vadd.f32 0.0, %v1439
    %v1441 = vpop.f32.mrf.mxu0
    %v1442 = vadd.f32 0.0, %v1441
    %v1443 = vpop.f32.mrf.mxu0
    %v1444 = vadd.f32 0.0, %v1443
    %1445 = vmatprep.mubr.bf16.mxu0 %v790
    %1446 = vmatmul.mubr.bf16.gmra.mxu0 %v789
    %v1447 = vpop.f32.mrf.mxu0
    %v1448 = vadd.f32 0.0, %v1447
    %v1449 = vpop.f32.mrf.mxu0
    %v1450 = vadd.f32 0.0, %v1449
    %v1451 = vpop.f32.mrf.mxu0
    %v1452 = vadd.f32 0.0, %v1451
    %v1453 = vpop.f32.mrf.mxu0
    %v1454 = vadd.f32 0.0, %v1453
    %1455 = vmatprep.mubr.bf16.mxu0 %v792
    %1456 = vmatmul.mubr.bf16.gmra.mxu0 %v791
    %v1457 = vpop.f32.mrf.mxu0
    %v1458 = vadd.f32 0.0, %v1457
    %v1459 = vpop.f32.mrf.mxu0
    %v1460 = vadd.f32 0.0, %v1459
    %v1461 = vpop.f32.mrf.mxu0
    %v1462 = vadd.f32 0.0, %v1461
    %v1463 = vpop.f32.mrf.mxu0
    %v1464 = vadd.f32 0.0, %v1463
    %1465 = vmatprep.mubr.bf16.mxu0 %v794
    %1466 = vmatmul.mubr.bf16.gmra.mxu0 %v793
    %v1467 = vpop.f32.mrf.mxu0
    %v1468 = vadd.f32 0.0, %v1467
    %v1469 = vpop.f32.mrf.mxu0
    %v1470 = vadd.f32 0.0, %v1469
    %v1471 = vpop.f32.mrf.mxu0
    %v1472 = vadd.f32 0.0, %v1471
    %v1473 = vpop.f32.mrf.mxu0
    %v1474 = vadd.f32 0.0, %v1473
    %1475 = vmatprep.mubr.bf16.mxu0 %v796
    %1476 = vmatmul.mubr.bf16.gmra.mxu0 %v795
    %v1477 = vpop.f32.mrf.mxu0
    %v1478 = vadd.f32 0.0, %v1477
    %v1479 = vpop.f32.mrf.mxu0
    %v1480 = vadd.f32 0.0, %v1479
    %v1481 = vpop.f32.mrf.mxu0
    %v1482 = vadd.f32 0.0, %v1481
    %v1483 = vpop.f32.mrf.mxu0
    %v1484 = vadd.f32 0.0, %v1483
    %1485 = vmatprep.mubr.bf16.mxu0 %v798
    %1486 = vmatmul.mubr.bf16.gmra.mxu0 %v797
    %v1487 = vpop.f32.mrf.mxu0
    %v1488 = vadd.f32 0.0, %v1487
    %v1489 = vpop.f32.mrf.mxu0
    %v1490 = vadd.f32 0.0, %v1489
    %v1491 = vpop.f32.mrf.mxu0
    %v1492 = vadd.f32 0.0, %v1491
    %v1493 = vpop.f32.mrf.mxu0
    %v1494 = vadd.f32 0.0, %v1493
    %1495 = vmatprep.mubr.bf16.mxu0 %v800
    %1496 = vmatmul.mubr.bf16.gmra.mxu0 %v799
    %v1497 = vpop.f32.mrf.mxu0
    %v1498 = vadd.f32 0.0, %v1497
    %v1499 = vpop.f32.mrf.mxu0
    %v1500 = vadd.f32 0.0, %v1499
    %v1501 = vpop.f32.mrf.mxu0
    %v1502 = vadd.f32 0.0, %v1501
    %v1503 = vpop.f32.mrf.mxu0
    %v1504 = vadd.f32 0.0, %v1503
    %1505 = vmatprep.mubr.bf16.mxu0 %v802
    %1506 = vmatmul.mubr.bf16.gmra.mxu0 %v801
    %v1507 = vpop.f32.mrf.mxu0
    %v1508 = vadd.f32 0.0, %v1507
    %v1509 = vpop.f32.mrf.mxu0
    %v1510 = vadd.f32 0.0, %v1509
    %v1511 = vpop.f32.mrf.mxu0
    %v1512 = vadd.f32 0.0, %v1511
    %v1513 = vpop.f32.mrf.mxu0
    %v1514 = vadd.f32 0.0, %v1513
    %1515 = vmatprep.mubr.bf16.mxu0 %v804
    %1516 = vmatmul.mubr.bf16.gmra.mxu0 %v803
    %v1517 = vpop.f32.mrf.mxu0
    %v1518 = vadd.f32 0.0, %v1517
    %v1519 = vpop.f32.mrf.mxu0
    %v1520 = vadd.f32 0.0, %v1519
    %v1521 = vpop.f32.mrf.mxu0
    %v1522 = vadd.f32 0.0, %v1521
    %v1523 = vpop.f32.mrf.mxu0
    %v1524 = vadd.f32 0.0, %v1523
    %1525 = vmatprep.mubr.bf16.mxu0 %v806
    %1526 = vmatmul.mubr.bf16.gmra.mxu0 %v805
    %v1527 = vpop.f32.mrf.mxu0
    %v1528 = vadd.f32 0.0, %v1527
    %v1529 = vpop.f32.mrf.mxu0
    %v1530 = vadd.f32 0.0, %v1529
    %v1531 = vpop.f32.mrf.mxu0
    %v1532 = vadd.f32 0.0, %v1531
    %v1533 = vpop.f32.mrf.mxu0
    %v1534 = vadd.f32 0.0, %v1533
    %1535 = vmatprep.mubr.bf16.mxu0 %v808
    %1536 = vmatmul.mubr.bf16.gmra.mxu0 %v807
    %v1537 = vpop.f32.mrf.mxu0
    %v1538 = vadd.f32 0.0, %v1537
    %v1539 = vpop.f32.mrf.mxu0
    %v1540 = vadd.f32 0.0, %v1539
    %v1541 = vpop.f32.mrf.mxu0
    %v1542 = vadd.f32 0.0, %v1541
    %v1543 = vpop.f32.mrf.mxu0
    %v1544 = vadd.f32 0.0, %v1543
    %1545 = vmatprep.mubr.bf16.mxu0 %v810
    %1546 = vmatmul.mubr.bf16.gmra.mxu0 %v809
    %v1547 = vpop.f32.mrf.mxu0
    %v1548 = vadd.f32 0.0, %v1547
    %v1549 = vpop.f32.mrf.mxu0
    %v1550 = vadd.f32 0.0, %v1549
    %v1551 = vpop.f32.mrf.mxu0
    %v1552 = vadd.f32 0.0, %v1551
    %v1553 = vpop.f32.mrf.mxu0
    %v1554 = vadd.f32 0.0, %v1553
    %1555 = vmatprep.mubr.bf16.mxu0 %v812
    %1556 = vmatmul.mubr.bf16.gmra.mxu0 %v811
    %v1557 = vpop.f32.mrf.mxu0
    %v1558 = vadd.f32 0.0, %v1557
    %v1559 = vpop.f32.mrf.mxu0
    %v1560 = vadd.f32 0.0, %v1559
    %v1561 = vpop.f32.mrf.mxu0
    %v1562 = vadd.f32 0.0, %v1561
    %v1563 = vpop.f32.mrf.mxu0
    %v1564 = vadd.f32 0.0, %v1563
    %1565 = vmatprep.mubr.bf16.mxu0 %v814
    %1566 = vmatmul.mubr.bf16.gmra.mxu0 %v813
    %v1567 = vpop.f32.mrf.mxu0
    %v1568 = vadd.f32 0.0, %v1567
    %v1569 = vpop.f32.mrf.mxu0
    %v1570 = vadd.f32 0.0, %v1569
    %v1571 = vpop.f32.mrf.mxu0
    %v1572 = vadd.f32 0.0, %v1571
    %v1573 = vpop.f32.mrf.mxu0
    %v1574 = vadd.f32 0.0, %v1573
    %1575 = vmatprep.mubr.bf16.mxu0 %v816
    %1576 = vmatmul.mubr.bf16.gmra.mxu0 %v815
    %v1577 = vpop.f32.mrf.mxu0
    %v1578 = vadd.f32 0.0, %v1577
    %v1579 = vpop.f32.mrf.mxu0
    %v1580 = vadd.f32 0.0, %v1579
    %v1581 = vpop.f32.mrf.mxu0
    %v1582 = vadd.f32 0.0, %v1581
    %v1583 = vpop.f32.mrf.mxu0
    %v1584 = vadd.f32 0.0, %v1583
    %1585 = vmatprep.mubr.bf16.mxu0 %v818
    %1586 = vmatmul.mubr.bf16.gmra.mxu0 %v817
    %v1587 = vpop.f32.mrf.mxu0
    %v1588 = vadd.f32 0.0, %v1587
    %v1589 = vpop.f32.mrf.mxu0
    %v1590 = vadd.f32 0.0, %v1589
    %v1591 = vpop.f32.mrf.mxu0
    %v1592 = vadd.f32 0.0, %v1591
    %v1593 = vpop.f32.mrf.mxu0
    %v1594 = vadd.f32 0.0, %v1593
    %1595 = vmatprep.mubr.bf16.mxu0 %v820
    %1596 = vmatmul.mubr.bf16.gmra.mxu0 %v819
    %v1597 = vpop.f32.mrf.mxu0
    %v1598 = vadd.f32 0.0, %v1597
    %v1599 = vpop.f32.mrf.mxu0
    %v1600 = vadd.f32 0.0, %v1599
    %v1601 = vpop.f32.mrf.mxu0
    %v1602 = vadd.f32 0.0, %v1601
    %v1603 = vpop.f32.mrf.mxu0
    %v1604 = vadd.f32 0.0, %v1603
    %1605 = vmatprep.mubr.bf16.mxu0 %v822
    %1606 = vmatmul.mubr.bf16.gmra.mxu0 %v821
    %v1607 = vpop.f32.mrf.mxu0
    %v1608 = vadd.f32 0.0, %v1607
    %v1609 = vpop.f32.mrf.mxu0
    %v1610 = vadd.f32 0.0, %v1609
    %v1611 = vpop.f32.mrf.mxu0
    %v1612 = vadd.f32 0.0, %v1611
    %v1613 = vpop.f32.mrf.mxu0
    %v1614 = vadd.f32 0.0, %v1613
    %1615 = vmatprep.mubr.bf16.mxu0 %v824
    %1616 = vmatmul.mubr.bf16.gmra.mxu0 %v823
    %v1617 = vpop.f32.mrf.mxu0
    %v1618 = vadd.f32 0.0, %v1617
    %v1619 = vpop.f32.mrf.mxu0
    %v1620 = vadd.f32 0.0, %v1619
    %v1621 = vpop.f32.mrf.mxu0
    %v1622 = vadd.f32 0.0, %v1621
    %v1623 = vpop.f32.mrf.mxu0
    %v1624 = vadd.f32 0.0, %v1623
    %1625 = vdwg.mxu0
    %1626 = vst [vmem:[%s2] sm:$0xff] %v988
    %vm1627 = vcmask 556032
    %1628 = vst.msk [vmem:[%s2 + $0x8] sm:$0xff] %vm1627, %v990
    %1629 = vst [vmem:[%s2 + $0x10] sm:$0xff] %v992
    %1630 = vst.msk [vmem:[%s2 + $0x18] sm:$0xff] %vm1627, %v994
    %1631 = vst [vmem:[%s2 + $0x20] sm:$0xff] %v998
    %1632 = vst.msk [vmem:[%s2 + $0x28] sm:$0xff] %vm1627, %v1000
    %1633 = vst [vmem:[%s2 + $0x30] sm:$0xff] %v1002
    %1634 = vst.msk [vmem:[%s2 + $0x38] sm:$0xff] %vm1627, %v1004
    %1635 = vst [vmem:[%s2 + $0x40] sm:$0xff] %v1008
    %1636 = vst.msk [vmem:[%s2 + $0x48] sm:$0xff] %vm1627, %v1010
    %1637 = vst [vmem:[%s2 + $0x50] sm:$0xff] %v1012
    %1638 = vst.msk [vmem:[%s2 + $0x58] sm:$0xff] %vm1627, %v1014
    %1639 = vst [vmem:[%s2 + $0x60] sm:$0xff] %v1018
    %1640 = vst.msk [vmem:[%s2 + $0x68] sm:$0xff] %vm1627, %v1020
    %1641 = vst [vmem:[%s2 + $0x70] sm:$0xff] %v1022
    %1642 = vst.msk [vmem:[%s2 + $0x78] sm:$0xff] %vm1627, %v1024
    %1643 = vst [vmem:[%s2 + $0x80] sm:$0xff] %v1028
    %1644 = vst.msk [vmem:[%s2 + $0x88] sm:$0xff] %vm1627, %v1030
    %1645 = vst [vmem:[%s2 + $0x90] sm:$0xff] %v1032
    %1646 = vst.msk [vmem:[%s2 + $0x98] sm:$0xff] %vm1627, %v1034
    %1647 = vst [vmem:[%s2 + $0xa0] sm:$0xff] %v1038
    %1648 = vst.msk [vmem:[%s2 + $0xa8] sm:$0xff] %vm1627, %v1040
    %1649 = vst [vmem:[%s2 + $0xb0] sm:$0xff] %v1042
    %1650 = vst.msk [vmem:[%s2 + $0xb8] sm:$0xff] %vm1627, %v1044
    %1651 = vst [vmem:[%s2 + $0xc0] sm:$0xff] %v1048
    %1652 = vst.msk [vmem:[%s2 + $0xc8] sm:$0xff] %vm1627, %v1050
    %1653 = vst [vmem:[%s2 + $0xd0] sm:$0xff] %v1052
    %1654 = vst.msk [vmem:[%s2 + $0xd8] sm:$0xff] %vm1627, %v1054
    %1655 = vst [vmem:[%s2 + $0xe0] sm:$0xff] %v1058
    %1656 = vst.msk [vmem:[%s2 + $0xe8] sm:$0xff] %vm1627, %v1060
    %1657 = vst [vmem:[%s2 + $0xf0] sm:$0xff] %v1062
    %1658 = vst.msk [vmem:[%s2 + $0xf8] sm:$0xff] %vm1627, %v1064
    %1659 = vst [vmem:[%s2 + $0x100] sm:$0xff] %v1068
    %1660 = vst.msk [vmem:[%s2 + $0x108] sm:$0xff] %vm1627, %v1070
    %1661 = vst [vmem:[%s2 + $0x110] sm:$0xff] %v1072
    %1662 = vst.msk [vmem:[%s2 + $0x118] sm:$0xff] %vm1627, %v1074
    %1663 = vst [vmem:[%s2 + $0x120] sm:$0xff] %v1078
    %1664 = vst.msk [vmem:[%s2 + $0x128] sm:$0xff] %vm1627, %v1080
    %1665 = vst [vmem:[%s2 + $0x130] sm:$0xff] %v1082
    %1666 = vst.msk [vmem:[%s2 + $0x138] sm:$0xff] %vm1627, %v1084
    %1667 = vst [vmem:[%s2 + $0x140] sm:$0xff] %v1088
    %1668 = vst.msk [vmem:[%s2 + $0x148] sm:$0xff] %vm1627, %v1090
    %1669 = vst [vmem:[%s2 + $0x150] sm:$0xff] %v1092
    %1670 = vst.msk [vmem:[%s2 + $0x158] sm:$0xff] %vm1627, %v1094
    %1671 = vst [vmem:[%s2 + $0x160] sm:$0xff] %v1098
    %1672 = vst.msk [vmem:[%s2 + $0x168] sm:$0xff] %vm1627, %v1100
    %1673 = vst [vmem:[%s2 + $0x170] sm:$0xff] %v1102
    %1674 = vst.msk [vmem:[%s2 + $0x178] sm:$0xff] %vm1627, %v1104
    %1675 = vst [vmem:[%s2 + $0x180] sm:$0xff] %v1108
    %1676 = vst.msk [vmem:[%s2 + $0x188] sm:$0xff] %vm1627, %v1110
    %1677 = vst [vmem:[%s2 + $0x190] sm:$0xff] %v1112
    %1678 = vst.msk [vmem:[%s2 + $0x198] sm:$0xff] %vm1627, %v1114
    %1679 = vst [vmem:[%s2 + $0x1a0] sm:$0xff] %v1118
    %1680 = vst.msk [vmem:[%s2 + $0x1a8] sm:$0xff] %vm1627, %v1120
    %1681 = vst [vmem:[%s2 + $0x1b0] sm:$0xff] %v1122
    %1682 = vst.msk [vmem:[%s2 + $0x1b8] sm:$0xff] %vm1627, %v1124
    %1683 = vst [vmem:[%s2 + $0x1c0] sm:$0xff] %v1128
    %1684 = vst.msk [vmem:[%s2 + $0x1c8] sm:$0xff] %vm1627, %v1130
    %1685 = vst [vmem:[%s2 + $0x1d0] sm:$0xff] %v1132
    %1686 = vst.msk [vmem:[%s2 + $0x1d8] sm:$0xff] %vm1627, %v1134
    %1687 = vst [vmem:[%s2 + $0x1e0] sm:$0xff] %v1138
    %1688 = vst.msk [vmem:[%s2 + $0x1e8] sm:$0xff] %vm1627, %v1140
    %1689 = vst [vmem:[%s2 + $0x1f0] sm:$0xff] %v1142
    %1690 = vst.msk [vmem:[%s2 + $0x1f8] sm:$0xff] %vm1627, %v1144
    %1691 = vst [vmem:[%s2 + $0x200] sm:$0xff] %v1148
    %1692 = vst.msk [vmem:[%s2 + $0x208] sm:$0xff] %vm1627, %v1150
    %1693 = vst [vmem:[%s2 + $0x210] sm:$0xff] %v1152
    %1694 = vst.msk [vmem:[%s2 + $0x218] sm:$0xff] %vm1627, %v1154
    %1695 = vst [vmem:[%s2 + $0x220] sm:$0xff] %v1158
    %1696 = vst.msk [vmem:[%s2 + $0x228] sm:$0xff] %vm1627, %v1160
    %1697 = vst [vmem:[%s2 + $0x230] sm:$0xff] %v1162
    %1698 = vst.msk [vmem:[%s2 + $0x238] sm:$0xff] %vm1627, %v1164
    %1699 = vst [vmem:[%s2 + $0x240] sm:$0xff] %v1168
    %1700 = vst.msk [vmem:[%s2 + $0x248] sm:$0xff] %vm1627, %v1170
    %1701 = vst [vmem:[%s2 + $0x250] sm:$0xff] %v1172
    %1702 = vst.msk [vmem:[%s2 + $0x258] sm:$0xff] %vm1627, %v1174
    %1703 = vst [vmem:[%s2 + $0x260] sm:$0xff] %v1178
    %1704 = vst.msk [vmem:[%s2 + $0x268] sm:$0xff] %vm1627, %v1180
    %1705 = vst [vmem:[%s2 + $0x270] sm:$0xff] %v1182
    %1706 = vst.msk [vmem:[%s2 + $0x278] sm:$0xff] %vm1627, %v1184
    %1707 = vst [vmem:[%s2 + $0x280] sm:$0xff] %v1188
    %1708 = vst.msk [vmem:[%s2 + $0x288] sm:$0xff] %vm1627, %v1190
    %1709 = vst [vmem:[%s2 + $0x290] sm:$0xff] %v1192
    %1710 = vst.msk [vmem:[%s2 + $0x298] sm:$0xff] %vm1627, %v1194
    %1711 = vst [vmem:[%s2 + $0x2a0] sm:$0xff] %v1198
    %1712 = vst.msk [vmem:[%s2 + $0x2a8] sm:$0xff] %vm1627, %v1200
    %1713 = vst [vmem:[%s2 + $0x2b0] sm:$0xff] %v1202
    %1714 = vst.msk [vmem:[%s2 + $0x2b8] sm:$0xff] %vm1627, %v1204
    %1715 = vst [vmem:[%s2 + $0x2c0] sm:$0xff] %v1208
    %1716 = vst.msk [vmem:[%s2 + $0x2c8] sm:$0xff] %vm1627, %v1210
    %1717 = vst [vmem:[%s2 + $0x2d0] sm:$0xff] %v1212
    %1718 = vst.msk [vmem:[%s2 + $0x2d8] sm:$0xff] %vm1627, %v1214
    %1719 = vst [vmem:[%s2 + $0x2e0] sm:$0xff] %v1218
    %1720 = vst.msk [vmem:[%s2 + $0x2e8] sm:$0xff] %vm1627, %v1220
    %1721 = vst [vmem:[%s2 + $0x2f0] sm:$0xff] %v1222
    %1722 = vst.msk [vmem:[%s2 + $0x2f8] sm:$0xff] %vm1627, %v1224
    %1723 = vst [vmem:[%s2 + $0x300] sm:$0xff] %v1228
    %1724 = vst.msk [vmem:[%s2 + $0x308] sm:$0xff] %vm1627, %v1230
    %1725 = vst [vmem:[%s2 + $0x310] sm:$0xff] %v1232
    %1726 = vst.msk [vmem:[%s2 + $0x318] sm:$0xff] %vm1627, %v1234
    %1727 = vst [vmem:[%s2 + $0x320] sm:$0xff] %v1238
    %1728 = vst.msk [vmem:[%s2 + $0x328] sm:$0xff] %vm1627, %v1240
    %1729 = vst [vmem:[%s2 + $0x330] sm:$0xff] %v1242
    %1730 = vst.msk [vmem:[%s2 + $0x338] sm:$0xff] %vm1627, %v1244
    %1731 = vst [vmem:[%s2 + $0x340] sm:$0xff] %v1248
    %1732 = vst.msk [vmem:[%s2 + $0x348] sm:$0xff] %vm1627, %v1250
    %1733 = vst [vmem:[%s2 + $0x350] sm:$0xff] %v1252
    %1734 = vst.msk [vmem:[%s2 + $0x358] sm:$0xff] %vm1627, %v1254
    %1735 = vst [vmem:[%s2 + $0x360] sm:$0xff] %v1258
    %1736 = vst.msk [vmem:[%s2 + $0x368] sm:$0xff] %vm1627, %v1260
    %1737 = vst [vmem:[%s2 + $0x370] sm:$0xff] %v1262
    %1738 = vst.msk [vmem:[%s2 + $0x378] sm:$0xff] %vm1627, %v1264
    %1739 = vst [vmem:[%s2 + $0x380] sm:$0xff] %v1268
    %1740 = vst.msk [vmem:[%s2 + $0x388] sm:$0xff] %vm1627, %v1270
    %1741 = vst [vmem:[%s2 + $0x390] sm:$0xff] %v1272
    %1742 = vst.msk [vmem:[%s2 + $0x398] sm:$0xff] %vm1627, %v1274
    %1743 = vst [vmem:[%s2 + $0x3a0] sm:$0xff] %v1278
    %1744 = vst.msk [vmem:[%s2 + $0x3a8] sm:$0xff] %vm1627, %v1280
    %1745 = vst [vmem:[%s2 + $0x3b0] sm:$0xff] %v1282
    %1746 = vst.msk [vmem:[%s2 + $0x3b8] sm:$0xff] %vm1627, %v1284
    %1747 = vst [vmem:[%s2 + $0x3c0] sm:$0xff] %v1288
    %1748 = vst.msk [vmem:[%s2 + $0x3c8] sm:$0xff] %vm1627, %v1290
    %1749 = vst [vmem:[%s2 + $0x3d0] sm:$0xff] %v1292
    %1750 = vst.msk [vmem:[%s2 + $0x3d8] sm:$0xff] %vm1627, %v1294
    %1751 = vst [vmem:[%s2 + $0x3e0] sm:$0xff] %v1298
    %1752 = vst.msk [vmem:[%s2 + $0x3e8] sm:$0xff] %vm1627, %v1300
    %1753 = vst [vmem:[%s2 + $0x3f0] sm:$0xff] %v1302
    %1754 = vst.msk [vmem:[%s2 + $0x3f8] sm:$0xff] %vm1627, %v1304
    %1755 = vst [vmem:[%s2 + $0x400] sm:$0xff] %v1308
    %1756 = vst.msk [vmem:[%s2 + $0x408] sm:$0xff] %vm1627, %v1310
    %1757 = vst [vmem:[%s2 + $0x410] sm:$0xff] %v1312
    %1758 = vst.msk [vmem:[%s2 + $0x418] sm:$0xff] %vm1627, %v1314
    %1759 = vst [vmem:[%s2 + $0x420] sm:$0xff] %v1318
    %1760 = vst.msk [vmem:[%s2 + $0x428] sm:$0xff] %vm1627, %v1320
    %1761 = vst [vmem:[%s2 + $0x430] sm:$0xff] %v1322
    %1762 = vst.msk [vmem:[%s2 + $0x438] sm:$0xff] %vm1627, %v1324
    %1763 = vst [vmem:[%s2 + $0x440] sm:$0xff] %v1328
    %1764 = vst.msk [vmem:[%s2 + $0x448] sm:$0xff] %vm1627, %v1330
    %1765 = vst [vmem:[%s2 + $0x450] sm:$0xff] %v1332
    %1766 = vst.msk [vmem:[%s2 + $0x458] sm:$0xff] %vm1627, %v1334
    %1767 = vst [vmem:[%s2 + $0x460] sm:$0xff] %v1338
    %1768 = vst.msk [vmem:[%s2 + $0x468] sm:$0xff] %vm1627, %v1340
    %1769 = vst [vmem:[%s2 + $0x470] sm:$0xff] %v1342
    %1770 = vst.msk [vmem:[%s2 + $0x478] sm:$0xff] %vm1627, %v1344
    %1771 = vst [vmem:[%s2 + $0x480] sm:$0xff] %v1348
    %1772 = vst.msk [vmem:[%s2 + $0x488] sm:$0xff] %vm1627, %v1350
    %1773 = vst [vmem:[%s2 + $0x490] sm:$0xff] %v1352
    %1774 = vst.msk [vmem:[%s2 + $0x498] sm:$0xff] %vm1627, %v1354
    %1775 = vst [vmem:[%s2 + $0x4a0] sm:$0xff] %v1358
    %1776 = vst.msk [vmem:[%s2 + $0x4a8] sm:$0xff] %vm1627, %v1360
    %1777 = vst [vmem:[%s2 + $0x4b0] sm:$0xff] %v1362
    %1778 = vst.msk [vmem:[%s2 + $0x4b8] sm:$0xff] %vm1627, %v1364
    %1779 = vst [vmem:[%s2 + $0x4c0] sm:$0xff] %v1368
    %1780 = vst.msk [vmem:[%s2 + $0x4c8] sm:$0xff] %vm1627, %v1370
    %1781 = vst [vmem:[%s2 + $0x4d0] sm:$0xff] %v1372
    %1782 = vst.msk [vmem:[%s2 + $0x4d8] sm:$0xff] %vm1627, %v1374
    %1783 = vst [vmem:[%s2 + $0x4e0] sm:$0xff] %v1378
    %1784 = vst.msk [vmem:[%s2 + $0x4e8] sm:$0xff] %vm1627, %v1380
    %1785 = vst [vmem:[%s2 + $0x4f0] sm:$0xff] %v1382
    %1786 = vst.msk [vmem:[%s2 + $0x4f8] sm:$0xff] %vm1627, %v1384
    %1787 = vst [vmem:[%s2 + $0x500] sm:$0xff] %v1388
    %1788 = vst.msk [vmem:[%s2 + $0x508] sm:$0xff] %vm1627, %v1390
    %1789 = vst [vmem:[%s2 + $0x510] sm:$0xff] %v1392
    %1790 = vst.msk [vmem:[%s2 + $0x518] sm:$0xff] %vm1627, %v1394
    %1791 = vst [vmem:[%s2 + $0x520] sm:$0xff] %v1398
    %1792 = vst.msk [vmem:[%s2 + $0x528] sm:$0xff] %vm1627, %v1400
    %1793 = vst [vmem:[%s2 + $0x530] sm:$0xff] %v1402
    %1794 = vst.msk [vmem:[%s2 + $0x538] sm:$0xff] %vm1627, %v1404
    %1795 = vst [vmem:[%s2 + $0x540] sm:$0xff] %v1408
    %1796 = vst.msk [vmem:[%s2 + $0x548] sm:$0xff] %vm1627, %v1410
    %1797 = vst [vmem:[%s2 + $0x550] sm:$0xff] %v1412
    %1798 = vst.msk [vmem:[%s2 + $0x558] sm:$0xff] %vm1627, %v1414
    %1799 = vst [vmem:[%s2 + $0x560] sm:$0xff] %v1418
    %1800 = vst.msk [vmem:[%s2 + $0x568] sm:$0xff] %vm1627, %v1420
    %1801 = vst [vmem:[%s2 + $0x570] sm:$0xff] %v1422
    %1802 = vst.msk [vmem:[%s2 + $0x578] sm:$0xff] %vm1627, %v1424
    %1803 = vst [vmem:[%s2 + $0x580] sm:$0xff] %v1428
    %1804 = vst.msk [vmem:[%s2 + $0x588] sm:$0xff] %vm1627, %v1430
    %1805 = vst [vmem:[%s2 + $0x590] sm:$0xff] %v1432
    %1806 = vst.msk [vmem:[%s2 + $0x598] sm:$0xff] %vm1627, %v1434
    %1807 = vst [vmem:[%s2 + $0x5a0] sm:$0xff] %v1438
    %1808 = vst.msk [vmem:[%s2 + $0x5a8] sm:$0xff] %vm1627, %v1440
    %1809 = vst [vmem:[%s2 + $0x5b0] sm:$0xff] %v1442
    %1810 = vst.msk [vmem:[%s2 + $0x5b8] sm:$0xff] %vm1627, %v1444
    %1811 = vst [vmem:[%s2 + $0x5c0] sm:$0xff] %v1448
    %1812 = vst.msk [vmem:[%s2 + $0x5c8] sm:$0xff] %vm1627, %v1450
    %1813 = vst [vmem:[%s2 + $0x5d0] sm:$0xff] %v1452
    %1814 = vst.msk [vmem:[%s2 + $0x5d8] sm:$0xff] %vm1627, %v1454
    %1815 = vst [vmem:[%s2 + $0x5e0] sm:$0xff] %v1458
    %1816 = vst.msk [vmem:[%s2 + $0x5e8] sm:$0xff] %vm1627, %v1460
    %1817 = vst [vmem:[%s2 + $0x5f0] sm:$0xff] %v1462
    %1818 = vst.msk [vmem:[%s2 + $0x5f8] sm:$0xff] %vm1627, %v1464
    %1819 = vst [vmem:[%s2 + $0x600] sm:$0xff] %v1468
    %1820 = vst.msk [vmem:[%s2 + $0x608] sm:$0xff] %vm1627, %v1470
    %1821 = vst [vmem:[%s2 + $0x610] sm:$0xff] %v1472
    %1822 = vst.msk [vmem:[%s2 + $0x618] sm:$0xff] %vm1627, %v1474
    %1823 = vst [vmem:[%s2 + $0x620] sm:$0xff] %v1478
    %1824 = vst.msk [vmem:[%s2 + $0x628] sm:$0xff] %vm1627, %v1480
    %1825 = vst [vmem:[%s2 + $0x630] sm:$0xff] %v1482
    %1826 = vst.msk [vmem:[%s2 + $0x638] sm:$0xff] %vm1627, %v1484
    %1827 = vst [vmem:[%s2 + $0x640] sm:$0xff] %v1488
    %1828 = vst.msk [vmem:[%s2 + $0x648] sm:$0xff] %vm1627, %v1490
    %1829 = vst [vmem:[%s2 + $0x650] sm:$0xff] %v1492
    %1830 = vst.msk [vmem:[%s2 + $0x658] sm:$0xff] %vm1627, %v1494
    %1831 = vst [vmem:[%s2 + $0x660] sm:$0xff] %v1498
    %1832 = vst.msk [vmem:[%s2 + $0x668] sm:$0xff] %vm1627, %v1500
    %1833 = vst [vmem:[%s2 + $0x670] sm:$0xff] %v1502
    %1834 = vst.msk [vmem:[%s2 + $0x678] sm:$0xff] %vm1627, %v1504
    %1835 = vst [vmem:[%s2 + $0x680] sm:$0xff] %v1508
    %1836 = vst.msk [vmem:[%s2 + $0x688] sm:$0xff] %vm1627, %v1510
    %1837 = vst [vmem:[%s2 + $0x690] sm:$0xff] %v1512
    %1838 = vst.msk [vmem:[%s2 + $0x698] sm:$0xff] %vm1627, %v1514
    %1839 = vst [vmem:[%s2 + $0x6a0] sm:$0xff] %v1518
    %1840 = vst.msk [vmem:[%s2 + $0x6a8] sm:$0xff] %vm1627, %v1520
    %1841 = vst [vmem:[%s2 + $0x6b0] sm:$0xff] %v1522
    %1842 = vst.msk [vmem:[%s2 + $0x6b8] sm:$0xff] %vm1627, %v1524
    %1843 = vst [vmem:[%s2 + $0x6c0] sm:$0xff] %v1528
    %1844 = vst.msk [vmem:[%s2 + $0x6c8] sm:$0xff] %vm1627, %v1530
    %1845 = vst [vmem:[%s2 + $0x6d0] sm:$0xff] %v1532
    %1846 = vst.msk [vmem:[%s2 + $0x6d8] sm:$0xff] %vm1627, %v1534
    %1847 = vst [vmem:[%s2 + $0x6e0] sm:$0xff] %v1538
    %1848 = vst.msk [vmem:[%s2 + $0x6e8] sm:$0xff] %vm1627, %v1540
    %1849 = vst [vmem:[%s2 + $0x6f0] sm:$0xff] %v1542
    %1850 = vst.msk [vmem:[%s2 + $0x6f8] sm:$0xff] %vm1627, %v1544
    %1851 = vst [vmem:[%s2 + $0x700] sm:$0xff] %v1548
    %1852 = vst.msk [vmem:[%s2 + $0x708] sm:$0xff] %vm1627, %v1550
    %1853 = vst [vmem:[%s2 + $0x710] sm:$0xff] %v1552
    %1854 = vst.msk [vmem:[%s2 + $0x718] sm:$0xff] %vm1627, %v1554
    %1855 = vst [vmem:[%s2 + $0x720] sm:$0xff] %v1558
    %1856 = vst.msk [vmem:[%s2 + $0x728] sm:$0xff] %vm1627, %v1560
    %1857 = vst [vmem:[%s2 + $0x730] sm:$0xff] %v1562
    %1858 = vst.msk [vmem:[%s2 + $0x738] sm:$0xff] %vm1627, %v1564
    %1859 = vst [vmem:[%s2 + $0x740] sm:$0xff] %v1568
    %1860 = vst.msk [vmem:[%s2 + $0x748] sm:$0xff] %vm1627, %v1570
    %1861 = vst [vmem:[%s2 + $0x750] sm:$0xff] %v1572
    %1862 = vst.msk [vmem:[%s2 + $0x758] sm:$0xff] %vm1627, %v1574
    %1863 = vst [vmem:[%s2 + $0x760] sm:$0xff] %v1578
    %1864 = vst.msk [vmem:[%s2 + $0x768] sm:$0xff] %vm1627, %v1580
    %1865 = vst [vmem:[%s2 + $0x770] sm:$0xff] %v1582
    %1866 = vst.msk [vmem:[%s2 + $0x778] sm:$0xff] %vm1627, %v1584
    %1867 = vst [vmem:[%s2 + $0x780] sm:$0xff] %v1588
    %1868 = vst.msk [vmem:[%s2 + $0x788] sm:$0xff] %vm1627, %v1590
    %1869 = vst [vmem:[%s2 + $0x790] sm:$0xff] %v1592
    %1870 = vst.msk [vmem:[%s2 + $0x798] sm:$0xff] %vm1627, %v1594
    %1871 = vst [vmem:[%s2 + $0x7a0] sm:$0xff] %v1598
    %1872 = vst.msk [vmem:[%s2 + $0x7a8] sm:$0xff] %vm1627, %v1600
    %1873 = vst [vmem:[%s2 + $0x7b0] sm:$0xff] %v1602
    %1874 = vst.msk [vmem:[%s2 + $0x7b8] sm:$0xff] %vm1627, %v1604
    %1875 = vst [vmem:[%s2 + $0x7c0] sm:$0xff] %v1608
    %1876 = vst.msk [vmem:[%s2 + $0x7c8] sm:$0xff] %vm1627, %v1610
    %1877 = vst [vmem:[%s2 + $0x7d0] sm:$0xff] %v1612
    %1878 = vst.msk [vmem:[%s2 + $0x7d8] sm:$0xff] %vm1627, %v1614
    %1879 = vst [vmem:[%s2 + $0x7e0] sm:$0xff] %v1618
    %1880 = vst.msk [vmem:[%s2 + $0x7e8] sm:$0xff] %vm1627, %v1620
    %1881 = vst [vmem:[%s2 + $0x7f0] sm:$0xff] %v1622
    %1882 = vst.msk [vmem:[%s2 + $0x7f8] sm:$0xff] %vm1627, %v1624
    // Predicated region
    $region14: #{tpu_custom_call.1} parent=1 // pred_check
      _
    $region15: #{tpu_custom_call.1} parent=1 // pred_check_branch
      %1884 = sbr.rel (0) target = $region17
    $region16: #{tpu_custom_call.1} parent=1 // pred_region
      _
    $region17: #{tpu_custom_call.1} parent=1 // pred_fallthru
      _
    // Predicated region
    $region18: #{tpu_custom_call.1} parent=1 // pred_check
      _
    $region19: #{tpu_custom_call.1} parent=1 // pred_check_branch
      %1886 = sbr.rel (0) target = $region21
    $region20: #{tpu_custom_call.1} parent=1 // pred_region
      _
    $region21: #{tpu_custom_call.1} parent=1 // pred_fallthru
      _
    %1887 = vsyncpa [#allocation3], 1

</llo_original>
